<compile_context>
chip_gen: v5e
topology: v5e:2x2
jax: 0.10.0
libtpu: 0.0.40
codegen_flags: <defaults>
</compile_context>

<pallas_src>
import functools

import numpy as np
import jax
import jax.numpy as jnp
from jax.experimental import pallas as pl
from jax.experimental.pallas import tpu as pltpu


def _round_up(x, m):
    return ((x + m - 1) // m) * m


# ---------------------------------------------------------------------------
# Fused kernel: positional encoding + MLP in one pass.
# ---------------------------------------------------------------------------
def _fused_kernel(*refs, freqs):
    # refs = (kp, W0, b0, W1, b1, ..., W_last, out, z_scratch)
    kp_ref = refs[0]
    wrefs = refs[1:-2]
    out_ref = refs[-2]
    z_ref = refs[-1]

    kp = kp_ref[...]                       # (TB, M), M = num_inputs * 2
    m = kp.shape[1]
    n_bands = len(freqs)

    # Build z lane-dense in VMEM:
    #   [ kp | sin(kp*f0) .. sin(kp*f_{H-1}) | cos(kp*f0) .. | zero pad ]
    # W0 rows were permuted/zero-padded offline so z @ W0_packed matches the
    # torch interleaved layout exactly.  Block width m=16 never straddles a
    # 128-lane tile boundary here.
    z_ref[...] = jnp.zeros_like(z_ref)     # zero the padded tail
    z_ref[:, 0:m] = kp
    for h, f in enumerate(freqs):
        z_ref[:, (1 + h) * m:(2 + h) * m] = jnp.sin(kp * f)
        z_ref[:, (1 + n_bands + h) * m:(2 + n_bands + h) * m] = jnp.cos(kp * f)

    act = z_ref[...]                       # (TB, K_pad)
    n_hidden = (len(wrefs) - 1) // 2       # Linear+bias+ReLU layers
    for i in range(n_hidden):
        w = wrefs[2 * i][...]
        b = wrefs[2 * i + 1][...]
        act = jnp.maximum(
            jnp.dot(act, w, preferred_element_type=jnp.float32) + b, 0.0)
    # Final Linear: no bias, no ReLU.
    out_ref[...] = jnp.dot(
        act, wrefs[-1][...], preferred_element_type=jnp.float32
    ).astype(out_ref.dtype)


# ---------------------------------------------------------------------------
# Parameters (torch-equivalent layout: W stored as (in, out) so y = x @ W + b)
# ---------------------------------------------------------------------------
def init_params(key, num_inputs, num_harmonics, num_channels, num_layers,
                output_channels):
    in_dim = num_inputs * (2 + 2 * 2 * num_harmonics)
    dims = ([in_dim] + [num_channels] * (1 + max(num_layers - 2, 0))
            + [output_channels])
    n_lin = len(dims) - 1
    ws, bs = [], []
    for i in range(n_lin):
        key, wk, bk = jax.random.split(key, 3)
        scale = 1.0 / jnp.sqrt(jnp.float32(dims[i]))
        ws.append(jax.random.uniform(wk, (dims[i], dims[i + 1]), jnp.float32,
                                     -scale, scale))
        if i < n_lin - 1:                  # last Linear has bias=False
            bs.append(jax.random.uniform(bk, (1, dims[i + 1]), jnp.float32,
                                         -scale, scale))
    freq = 2.0 ** jnp.linspace(0.0, num_harmonics - 1, num_harmonics)
    return {"freq": freq.astype(jnp.float32), "ws": ws, "bs": bs}


def _block_permutation(num_inputs, num_harmonics):
    """perm[j] = interleaved (torch) column index of block-layout column j."""
    m = num_inputs * 2
    width = 1 + 2 * num_harmonics
    coords = np.arange(m, dtype=np.int32) * width
    perm = np.empty(m * width, dtype=np.int32)
    perm[0:m] = coords                                        # kp
    for h in range(num_harmonics):
        perm[m * (1 + h): m * (2 + h)] = coords + 1 + h       # sin(f_h)
        perm[m * (1 + num_harmonics + h): m * (2 + num_harmonics + h)] = (
            coords + 1 + num_harmonics + h)                   # cos(f_h)
    return perm


def pack_params(params, num_inputs):
    """Permute W0 rows to the block layout and zero-pad all dims to 128."""
    H = int(params["freq"].shape[0])
    ws, bs = params["ws"], params["bs"]
    in_dim = ws[0].shape[0]
    hid = ws[0].shape[1]
    out_dim = ws[-1].shape[1]

    k_pad = _round_up(in_dim, 128)
    hid_pad = _round_up(hid, 128)
    out_pad = _round_up(out_dim, 128)

    perm = _block_permutation(num_inputs, H)
    packed_ws = [jnp.pad(ws[0][perm, :],
                         ((0, k_pad - in_dim), (0, hid_pad - hid)))]
    packed_bs = [jnp.pad(bs[0], ((0, 0), (0, hid_pad - bs[0].shape[1])))]
    for w, b in zip(ws[1:-1], bs[1:]):
        packed_ws.append(jnp.pad(w, ((0, hid_pad - w.shape[0]),
                                     (0, hid_pad - w.shape[1]))))
        packed_bs.append(jnp.pad(b, ((0, 0), (0, hid_pad - b.shape[1]))))
    packed_ws.append(jnp.pad(ws[-1], ((0, hid_pad - ws[-1].shape[0]),
                                      (0, out_pad - out_dim))))
    return {"ws": packed_ws, "bs": packed_bs,
            "num_harmonics": H, "out_dim": out_dim}


# ---------------------------------------------------------------------------
# Forward wrapper: one fused pallas_call, batch-gridded.
# ---------------------------------------------------------------------------
def keypoints_encoder(kp, packed, *, tile_b=256):
    B, N, two = kp.shape
    assert two == 2
    H = packed["num_harmonics"]
    ws, bs = packed["ws"], packed["bs"]
    k_pad = ws[0].shape[0]
    out_pad = ws[-1].shape[1]
    M = N * 2

    kp2 = kp.reshape(B, M).astype(jnp.float32)

    # Batch tile: sublane-aligned, capped at 256 rows (MXU height on v6e/v7x).
    tb = min(tile_b, _round_up(B, 8))
    b_pad = _round_up(B, tb)
    if b_pad != B:
        kp2 = jnp.pad(kp2, ((0, b_pad - B), (0, 0)))

    # 2**linspace(0, H-1, H) == exact powers of two for integer H.
    freqs = tuple(float(2.0 ** h) for h in range(H))

    weight_args = []
    for w, b in zip(ws[:-1], bs):
        weight_args += [w, b]
    weight_args.append(ws[-1])

    in_specs = [pl.BlockSpec((tb, M), lambda i: (i, 0))]
    # Weights/biases: full block, constant index map -> stay VMEM-resident.
    in_specs += [pl.BlockSpec(a.shape, lambda i: (0, 0)) for a in weight_args]

    out = pl.pallas_call(
        functools.partial(_fused_kernel, freqs=freqs),
        out_shape=jax.ShapeDtypeStruct((b_pad, out_pad), jnp.float32),
        grid=(b_pad // tb,),
        in_specs=in_specs,
        out_specs=pl.BlockSpec((tb, out_pad), lambda i: (i, 0)),
        scratch_shapes=[pltpu.VMEM((tb, k_pad), jnp.float32)],
        compiler_params=pltpu.CompilerParams(
            dimension_semantics=("parallel",)),
    )(kp2, *weight_args)

    return out[:B, :packed["out_dim"]]


# ---------------------------------------------------------------------------
# Pure-JAX reference (torch-equivalent interleaved layout, unpadded weights).
# ---------------------------------------------------------------------------
def reference_forward(kp, params):
    B = kp.shape[0]
    kpe = kp[..., None]
    freq = params["freq"]
    z = jnp.concatenate(
        [kpe, jnp.sin(kpe * freq), jnp.cos(kpe * freq)], axis=3).reshape(B, -1)
    h = z
    for w, b in zip(params["ws"][:-1], params["bs"]):
        h = jnp.maximum(h @ w + b, 0.0)
    return h @ params["ws"][-1]


if __name__ == "__main__":
    B = 2
    num_inputs = 8
    num_harmonics = 4
    num_channels = 32
    num_layers = 3
    output_channels = 16
    output_size = 4  # unused by forward(); kept only for module parity

    key = jax.random.PRNGKey(0)
    kp_key, p_key, big_key = jax.random.split(key, 3)
    kp = jax.random.normal(kp_key, (B, num_inputs, 2), jnp.float32)

    params = init_params(p_key, num_inputs, num_harmonics, num_channels,
                         num_layers, output_channels)
    packed = pack_params(params, num_inputs)

    out = jax.block_until_ready(keypoints_encoder(kp, packed))
    ref = reference_forward(kp, params)
    assert out.shape == (B, output_channels), out.shape
    assert jnp.allclose(out, ref, atol=1e-4, rtol=1e-4), \
        float(jnp.max(jnp.abs(out - ref)))

    # Also exercise the batch grid + padding path (grid > 1, B not tile-aligned).
    kp_big = jax.random.normal(big_key, (300, num_inputs, 2), jnp.float32)
    out_big = jax.block_until_ready(keypoints_encoder(kp_big, packed))
    ref_big = reference_forward(kp_big, params)
    assert out_big.shape == (300, output_channels), out_big.shape
    assert jnp.allclose(out_big, ref_big, atol=1e-4, rtol=1e-4), \
        float(jnp.max(jnp.abs(out_big - ref_big)))

    print("KERNEL_OK")
</pallas_src>

<mosaic_0001>
module attributes {stable_mosaic.version = 11 : i64} {
  func.func @_fused_kernel(%arg0: i32, %arg1: memref<8x16xf32, #tpu.memory_space<vmem>>, %arg2: memref<256x128xf32, #tpu.memory_space<vmem>>, %arg3: memref<1x128xf32, #tpu.memory_space<vmem>>, %arg4: memref<128x128xf32, #tpu.memory_space<vmem>>, %arg5: memref<1x128xf32, #tpu.memory_space<vmem>>, %arg6: memref<128x128xf32, #tpu.memory_space<vmem>>, %arg7: memref<8x128xf32, #tpu.memory_space<vmem>>, %arg8: memref<8x256xf32, #tpu.memory_space<vmem>>) attributes {dimension_semantics = [#tpu.dimension_semantics<parallel>], iteration_bounds = array<i64: 1>, scalar_prefetch = 0 : i64, scratch_operands = 1 : i64, tpu.core_type = #tpu.core_type<tc>, window_params = [{transform_indices = @transform_0, window_bounds = array<i64: 8, 16>}, {pipeline_mode = #tpu.pipeline_mode<synchronous>, transform_indices = @transform_1, window_bounds = array<i64: 256, 128>}, {pipeline_mode = #tpu.pipeline_mode<synchronous>, transform_indices = @transform_2, window_bounds = array<i64: 1, 128>}, {pipeline_mode = #tpu.pipeline_mode<synchronous>, transform_indices = @transform_3, window_bounds = array<i64: 128, 128>}, {pipeline_mode = #tpu.pipeline_mode<synchronous>, transform_indices = @transform_4, window_bounds = array<i64: 1, 128>}, {pipeline_mode = #tpu.pipeline_mode<synchronous>, transform_indices = @transform_5, window_bounds = array<i64: 128, 128>}, {transform_indices = @transform_6, window_bounds = array<i64: 8, 128>}]} {
    %c0 = arith.constant 0 : index
    %c0_0 = arith.constant 0 : index
    %0 = vector.load %arg1[%c0, %c0_0] : memref<8x16xf32, #tpu.memory_space<vmem>>, vector<8x16xf32>
    %cst = arith.constant 0.000000e+00 : f32
    %1 = vector.broadcast %cst : f32 to vector<8x256xf32>
    %c0_1 = arith.constant 0 : index
    %c0_2 = arith.constant 0 : index
    %2 = vector.load %arg8[%c0_1, %c0_2] : memref<8x256xf32, #tpu.memory_space<vmem>>, vector<8x256xf32>
    tpu.vector_store %arg8[%c0_1, %c0_2], %1 {strides = array<i32>} : memref<8x256xf32, #tpu.memory_space<vmem>>, vector<8x256xf32>,
    %c0_3 = arith.constant 0 : index
    %c0_4 = arith.constant 0 : index
    %3 = vector.load %arg8[%c0_3, %c0_4] : memref<8x256xf32, #tpu.memory_space<vmem>>, vector<8x16xf32>
    tpu.vector_store %arg8[%c0_3, %c0_4], %0 {strides = array<i32>} : memref<8x256xf32, #tpu.memory_space<vmem>>, vector<8x16xf32>,
    %cst_5 = arith.constant 1.000000e+00 : f32
    %4 = vector.broadcast %cst_5 : f32 to vector<8x16xf32>
    %5 = arith.mulf %0, %4 : vector<8x16xf32>
    %6 = math.sin %5 : vector<8x16xf32>
    %c0_6 = arith.constant 0 : index
    %c16 = arith.constant 16 : index
    %7 = vector.load %arg8[%c0_6, %c16] : memref<8x256xf32, #tpu.memory_space<vmem>>, vector<8x16xf32>
    tpu.vector_store %arg8[%c0_6, %c16], %6 {strides = array<i32>} : memref<8x256xf32, #tpu.memory_space<vmem>>, vector<8x16xf32>,
    %cst_7 = arith.constant 1.000000e+00 : f32
    %8 = vector.broadcast %cst_7 : f32 to vector<8x16xf32>
    %9 = arith.mulf %0, %8 : vector<8x16xf32>
    %10 = math.cos %9 : vector<8x16xf32>
    %c0_8 = arith.constant 0 : index
    %c80 = arith.constant 80 : index
    %11 = vector.load %arg8[%c0_8, %c80] : memref<8x256xf32, #tpu.memory_space<vmem>>, vector<8x16xf32>
    tpu.vector_store %arg8[%c0_8, %c80], %10 {strides = array<i32>} : memref<8x256xf32, #tpu.memory_space<vmem>>, vector<8x16xf32>,
    %cst_9 = arith.constant 2.000000e+00 : f32
    %12 = vector.broadcast %cst_9 : f32 to vector<8x16xf32>
    %13 = arith.mulf %0, %12 : vector<8x16xf32>
    %14 = math.sin %13 : vector<8x16xf32>
    %c0_10 = arith.constant 0 : index
    %c32 = arith.constant 32 : index
    %15 = vector.load %arg8[%c0_10, %c32] : memref<8x256xf32, #tpu.memory_space<vmem>>, vector<8x16xf32>
    tpu.vector_store %arg8[%c0_10, %c32], %14 {strides = array<i32>} : memref<8x256xf32, #tpu.memory_space<vmem>>, vector<8x16xf32>,
    %cst_11 = arith.constant 2.000000e+00 : f32
    %16 = vector.broadcast %cst_11 : f32 to vector<8x16xf32>
    %17 = arith.mulf %0, %16 : vector<8x16xf32>
    %18 = math.cos %17 : vector<8x16xf32>
    %c0_12 = arith.constant 0 : index
    %c96 = arith.constant 96 : index
    %19 = vector.load %arg8[%c0_12, %c96] : memref<8x256xf32, #tpu.memory_space<vmem>>, vector<8x16xf32>
    tpu.vector_store %arg8[%c0_12, %c96], %18 {strides = array<i32>} : memref<8x256xf32, #tpu.memory_space<vmem>>, vector<8x16xf32>,
    %cst_13 = arith.constant 4.000000e+00 : f32
    %20 = vector.broadcast %cst_13 : f32 to vector<8x16xf32>
    %21 = arith.mulf %0, %20 : vector<8x16xf32>
    %22 = math.sin %21 : vector<8x16xf32>
    %c0_14 = arith.constant 0 : index
    %c48 = arith.constant 48 : index
    %23 = vector.load %arg8[%c0_14, %c48] : memref<8x256xf32, #tpu.memory_space<vmem>>, vector<8x16xf32>
    tpu.vector_store %arg8[%c0_14, %c48], %22 {strides = array<i32>} : memref<8x256xf32, #tpu.memory_space<vmem>>, vector<8x16xf32>,
    %cst_15 = arith.constant 4.000000e+00 : f32
    %24 = vector.broadcast %cst_15 : f32 to vector<8x16xf32>
    %25 = arith.mulf %0, %24 : vector<8x16xf32>
    %26 = math.cos %25 : vector<8x16xf32>
    %c0_16 = arith.constant 0 : index
    %c112 = arith.constant 112 : index
    %27 = vector.load %arg8[%c0_16, %c112] : memref<8x256xf32, #tpu.memory_space<vmem>>, vector<8x16xf32>
    tpu.vector_store %arg8[%c0_16, %c112], %26 {strides = array<i32>} : memref<8x256xf32, #tpu.memory_space<vmem>>, vector<8x16xf32>,
    %cst_17 = arith.constant 8.000000e+00 : f32
    %28 = vector.broadcast %cst_17 : f32 to vector<8x16xf32>
    %29 = arith.mulf %0, %28 : vector<8x16xf32>
    %30 = math.sin %29 : vector<8x16xf32>
    %c0_18 = arith.constant 0 : index
    %c64 = arith.constant 64 : index
    %31 = vector.load %arg8[%c0_18, %c64] : memref<8x256xf32, #tpu.memory_space<vmem>>, vector<8x16xf32>
    tpu.vector_store %arg8[%c0_18, %c64], %30 {strides = array<i32>} : memref<8x256xf32, #tpu.memory_space<vmem>>, vector<8x16xf32>,
    %cst_19 = arith.constant 8.000000e+00 : f32
    %32 = vector.broadcast %cst_19 : f32 to vector<8x16xf32>
    %33 = arith.mulf %0, %32 : vector<8x16xf32>
    %34 = math.cos %33 : vector<8x16xf32>
    %c0_20 = arith.constant 0 : index
    %c128 = arith.constant 128 : index
    %35 = vector.load %arg8[%c0_20, %c128] : memref<8x256xf32, #tpu.memory_space<vmem>>, vector<8x16xf32>
    tpu.vector_store %arg8[%c0_20, %c128], %34 {strides = array<i32>} : memref<8x256xf32, #tpu.memory_space<vmem>>, vector<8x16xf32>,
    %c0_21 = arith.constant 0 : index
    %c0_22 = arith.constant 0 : index
    %36 = vector.load %arg8[%c0_21, %c0_22] : memref<8x256xf32, #tpu.memory_space<vmem>>, vector<8x256xf32>
    %c0_23 = arith.constant 0 : index
    %c0_24 = arith.constant 0 : index
    %37 = vector.load %arg2[%c0_23, %c0_24] : memref<256x128xf32, #tpu.memory_space<vmem>>, vector<256x128xf32>
    %c0_25 = arith.constant 0 : index
    %c0_26 = arith.constant 0 : index
    %38 = vector.load %arg3[%c0_25, %c0_26] : memref<1x128xf32, #tpu.memory_space<vmem>>, vector<1x128xf32>
    %cst_27 = arith.constant dense<0.000000e+00> : vector<8x128xf32>
    %39 = tpu.matmul %36, %37, %cst_27 {dimension_numbers = #tpu.dot_dimension_numbers<[1], [0], [0], [1], [0, 0, 1, 1], [], []>} : vector<8x256xf32>, vector<256x128xf32>, vector<8x128xf32> -> vector<8x128xf32>
    %40 = vector.broadcast %38 : vector<1x128xf32> to vector<8x128xf32>
    %41 = arith.addf %39, %40 : vector<8x128xf32>
    %cst_28 = arith.constant 0.000000e+00 : f32
    %42 = vector.broadcast %cst_28 : f32 to vector<8x128xf32>
    %43 = arith.maximumf %41, %42 : vector<8x128xf32>
    %c0_29 = arith.constant 0 : index
    %c0_30 = arith.constant 0 : index
    %44 = vector.load %arg4[%c0_29, %c0_30] : memref<128x128xf32, #tpu.memory_space<vmem>>, vector<128x128xf32>
    %c0_31 = arith.constant 0 : index
    %c0_32 = arith.constant 0 : index
    %45 = vector.load %arg5[%c0_31, %c0_32] : memref<1x128xf32, #tpu.memory_space<vmem>>, vector<1x128xf32>
    %cst_33 = arith.constant dense<0.000000e+00> : vector<8x128xf32>
    %46 = tpu.matmul %43, %44, %cst_33 {dimension_numbers = #tpu.dot_dimension_numbers<[1], [0], [0], [1], [0, 0, 1, 1], [], []>} : vector<8x128xf32>, vector<128x128xf32>, vector<8x128xf32> -> vector<8x128xf32>
    %47 = vector.broadcast %45 : vector<1x128xf32> to vector<8x128xf32>
    %48 = arith.addf %46, %47 : vector<8x128xf32>
    %cst_34 = arith.constant 0.000000e+00 : f32
    %49 = vector.broadcast %cst_34 : f32 to vector<8x128xf32>
    %50 = arith.maximumf %48, %49 : vector<8x128xf32>
    %c0_35 = arith.constant 0 : index
    %c0_36 = arith.constant 0 : index
    %51 = vector.load %arg6[%c0_35, %c0_36] : memref<128x128xf32, #tpu.memory_space<vmem>>, vector<128x128xf32>
    %cst_37 = arith.constant dense<0.000000e+00> : vector<8x128xf32>
    %52 = tpu.matmul %50, %51, %cst_37 {dimension_numbers = #tpu.dot_dimension_numbers<[1], [0], [0], [1], [0, 0, 1, 1], [], []>} : vector<8x128xf32>, vector<128x128xf32>, vector<8x128xf32> -> vector<8x128xf32>
    %c0_38 = arith.constant 0 : index
    %c0_39 = arith.constant 0 : index
    %53 = vector.load %arg7[%c0_38, %c0_39] : memref<8x128xf32, #tpu.memory_space<vmem>>, vector<8x128xf32>
    tpu.vector_store %arg7[%c0_38, %c0_39], %52 {strides = array<i32>} : memref<8x128xf32, #tpu.memory_space<vmem>>, vector<8x128xf32>,
    return
  }
  func.func @transform_0(%arg0: i32) -> (i32, i32) {
    %c0_i32 = arith.constant 0 : i32
    %c0_i32_0 = arith.constant 0 : i32
    return %arg0, %c0_i32 : i32, i32
  }
  func.func @transform_1(%arg0: i32) -> (i32, i32) {
    %c0_i32 = arith.constant 0 : i32
    %c0_i32_0 = arith.constant 0 : i32
    %c0_i32_1 = arith.constant 0 : i32
    return %c0_i32, %c0_i32_0 : i32, i32
  }
  func.func @transform_2(%arg0: i32) -> (i32, i32) {
    %c0_i32 = arith.constant 0 : i32
    %c0_i32_0 = arith.constant 0 : i32
    %c0_i32_1 = arith.constant 0 : i32
    return %c0_i32, %c0_i32_0 : i32, i32
  }
  func.func @transform_3(%arg0: i32) -> (i32, i32) {
    %c0_i32 = arith.constant 0 : i32
    %c0_i32_0 = arith.constant 0 : i32
    %c0_i32_1 = arith.constant 0 : i32
    return %c0_i32, %c0_i32_0 : i32, i32
  }
  func.func @transform_4(%arg0: i32) -> (i32, i32) {
    %c0_i32 = arith.constant 0 : i32
    %c0_i32_0 = arith.constant 0 : i32
    %c0_i32_1 = arith.constant 0 : i32
    return %c0_i32, %c0_i32_0 : i32, i32
  }
  func.func @transform_5(%arg0: i32) -> (i32, i32) {
    %c0_i32 = arith.constant 0 : i32
    %c0_i32_0 = arith.constant 0 : i32
    %c0_i32_1 = arith.constant 0 : i32
    return %c0_i32, %c0_i32_0 : i32, i32
  }
  func.func @transform_6(%arg0: i32) -> (i32, i32) {
    %c0_i32 = arith.constant 0 : i32
    %c0_i32_0 = arith.constant 0 : i32
    return %arg0, %c0_i32 : i32, i32
  }
}

</mosaic_0001>

<llo_original>
// kernel: tpu_custom_call.1
$region0: #{tpu_custom_call.1}
  #allocation0 [shape = 'u32[]', space=smem, size = 0x4, offset = 0x4, fixed_abs, tag = 'smem constant byte address 0x4 - core index']
  #allocation1 [shape = 'u32[72,128]{1,0:T(1,128)}', space=vmem, size = 0x9000, scoped, tag = 'internal scratch']
  #allocation2 [shape = 'f32[8,256]{1,0:T(8,128)}', space=vmem, size = 0x2000, scoped, tag = 'scratch operand']
  %s0 = inlined_call_operand.hbm [shape: f32[8,16], index: 0, kind: input, shape index: {}]
  %s1 = inlined_call_operand.hbm [shape: f32[256,128], index: 1, kind: input, shape index: {}]
  %s2 = inlined_call_operand.vmem [shape: f32[1,128], index: 2, kind: input, shape index: {}]
  %s3 = inlined_call_operand.hbm [shape: f32[128,128], index: 3, kind: input, shape index: {}]
  %s4 = inlined_call_operand.vmem [shape: f32[1,128], index: 4, kind: input, shape index: {}]
  %s5 = inlined_call_operand.hbm [shape: f32[128,128], index: 5, kind: input, shape index: {}]
  %s6 = inlined_call_operand.hbm [shape: f32[8,128], index: 6, kind: output, shape index: {}]
  %s7 = sld [smem:[#allocation0]]
  $region50: #{tpu_custom_call.1} parent=0
    _
  %s9 = ssub.s32 1, %s7
  %s10 = scalar_select 0, %s9, %s7
  $region1: #{tpu_custom_call.1} parent=0
    #allocation3 [shape = 'u8[4096]{0}', space=vmem, size = 0x1000, scoped, tag = 'input window, operand 0, single buffered']
    #allocation4 [shape = 's32[1]{0}', space=sflag, size = 0x4, scoped, tag = 'scoped memory for tpu_custom_call.1']
    #allocation5 [shape = 's32[1]{0}', space=sflag, size = 0x4, scoped, tag = 'scoped memory for tpu_custom_call.1']
    #allocation6 [shape = 'u8[131072]{0}', space=vmem, size = 0x20000, scoped, tag = 'input window, operand 1, single buffered']
    #allocation7 [shape = 's32[1]{0}', space=sflag, size = 0x4, scoped, tag = 'scoped memory for tpu_custom_call.1']
    #allocation8 [shape = 'u8[65536]{0}', space=vmem, size = 0x10000, scoped, tag = 'input window, operand 3, single buffered']
    #allocation9 [shape = 'u8[65536]{0}', space=vmem, size = 0x10000, scoped, tag = 'input window, operand 5, single buffered']
    #allocation10 [shape = 's32[1]{0}', space=sflag, size = 0x4, scoped, tag = 'scoped memory for tpu_custom_call.1']
    #allocation11 [shape = 'u8[4096]{0}', space=vmem, size = 0x1000, scoped, tag = 'output window, operand 0, single buffered']
    %11 = vsyncpa [#allocation4], 0
    %12 = vsyncpa [#allocation7], 0
    %13 = vsyncpa [#allocation10], 0
    %14 = vsyncpa [#allocation5], 0
    // Predicated region
    $region2: #{tpu_custom_call.1} parent=1 // pred_check
      _
    $region3: #{tpu_custom_call.1} parent=1 // pred_check_branch
      %16 = sbr.rel (0) target = $region5
    $region4: #{tpu_custom_call.1} parent=1 // pred_region
      %18 = vsyncadd [#allocation4], 0
      %s20 = sshll.u32 %s0, 4
      %s21 = int_to_ptr.hbm [resolvable:$true] %s20
      %s22 = sshll.u32 [#allocation3], 4
      %s23 = int_to_ptr.vmem [resolvable:$true] %s22
      %25 = dma.hbm_to_vmem [thread:$0]  %s21, 128, %s23, [#allocation4]
    $region5: #{tpu_custom_call.1} parent=1 // pred_fallthru
      _
    // Predicated region
    $region6: #{tpu_custom_call.1} parent=1 // pred_check
      _
    $region7: #{tpu_custom_call.1} parent=1 // pred_check_branch
      %27 = sbr.rel (0) target = $region9
    $region8: #{tpu_custom_call.1} parent=1 // pred_region
      %29 = vsyncadd [#allocation7], 0
      %s30 = sshll.u32 %s1, 4
      %s31 = int_to_ptr.hbm [resolvable:$true] %s30
      %s32 = sshll.u32 [#allocation6], 4
      %s33 = int_to_ptr.vmem [resolvable:$true] %s32
      %38 = dma.hbm_to_vmem [thread:$0]  %s31, 4096, %s33, [#allocation7], 128, 128, 8
    $region9: #{tpu_custom_call.1} parent=1 // pred_fallthru
      _
    // Predicated region
    $region10: #{tpu_custom_call.1} parent=1 // pred_check
      _
    $region11: #{tpu_custom_call.1} parent=1 // pred_check_branch
      %40 = sbr.rel (0) target = $region13
    $region12: #{tpu_custom_call.1} parent=1 // pred_region
      _
    $region13: #{tpu_custom_call.1} parent=1 // pred_fallthru
      _
    // Predicated region
    $region14: #{tpu_custom_call.1} parent=1 // pred_check
      _
    $region15: #{tpu_custom_call.1} parent=1 // pred_check_branch
      %42 = sbr.rel (0) target = $region17
    $region16: #{tpu_custom_call.1} parent=1 // pred_region
      %44 = vsyncadd [#allocation7], 0
      %s45 = sshll.u32 %s3, 4
      %s46 = int_to_ptr.hbm [resolvable:$true] %s45
      %s47 = sshll.u32 [#allocation8], 4
      %s48 = int_to_ptr.vmem [resolvable:$true] %s47
      %53 = dma.hbm_to_vmem [thread:$0]  %s46, 2048, %s48, [#allocation7], 128, 128, 8
    $region17: #{tpu_custom_call.1} parent=1 // pred_fallthru
      _
    // Predicated region
    $region18: #{tpu_custom_call.1} parent=1 // pred_check
      _
    $region19: #{tpu_custom_call.1} parent=1 // pred_check_branch
      %55 = sbr.rel (0) target = $region21
    $region20: #{tpu_custom_call.1} parent=1 // pred_region
      _
    $region21: #{tpu_custom_call.1} parent=1 // pred_fallthru
      _
    // Predicated region
    $region22: #{tpu_custom_call.1} parent=1 // pred_check
      _
    $region23: #{tpu_custom_call.1} parent=1 // pred_check_branch
      %57 = sbr.rel (0) target = $region25
    $region24: #{tpu_custom_call.1} parent=1 // pred_region
      %59 = vsyncadd [#allocation10], 0
      %s60 = sshll.u32 %s5, 4
      %s61 = int_to_ptr.hbm [resolvable:$true] %s60
      %s62 = sshll.u32 [#allocation9], 4
      %s63 = int_to_ptr.vmem [resolvable:$true] %s62
      %68 = dma.hbm_to_vmem [thread:$0]  %s61, 2048, %s63, [#allocation10], 128, 128, 8
    $region25: #{tpu_custom_call.1} parent=1 // pred_fallthru
      _
    // Predicated region
    $region26: #{tpu_custom_call.1} parent=1 // pred_check
      _
    $region27: #{tpu_custom_call.1} parent=1 // pred_check_branch
      %70 = sbr.rel (0) target = $region29
    $region28: #{tpu_custom_call.1} parent=1 // pred_region
      %72 = dma.done [#allocation4], 128
    $region29: #{tpu_custom_call.1} parent=1 // pred_fallthru
      _
    // Predicated region
    $region30: #{tpu_custom_call.1} parent=1 // pred_check
      _
    $region31: #{tpu_custom_call.1} parent=1 // pred_check_branch
      %74 = sbr.rel (0) target = $region33
    $region32: #{tpu_custom_call.1} parent=1 // pred_region
      %76 = dma.done [#allocation7], 4096
    $region33: #{tpu_custom_call.1} parent=1 // pred_fallthru
      _
    // Predicated region
    $region34: #{tpu_custom_call.1} parent=1 // pred_check
      _
    $region35: #{tpu_custom_call.1} parent=1 // pred_check_branch
      %78 = sbr.rel (0) target = $region37
    $region36: #{tpu_custom_call.1} parent=1 // pred_region
      %80 = dma.done [#allocation7], 2048
    $region37: #{tpu_custom_call.1} parent=1 // pred_fallthru
      _
    // Predicated region
    $region38: #{tpu_custom_call.1} parent=1 // pred_check
      _
    $region39: #{tpu_custom_call.1} parent=1 // pred_check_branch
      %82 = sbr.rel (0) target = $region41
    $region40: #{tpu_custom_call.1} parent=1 // pred_region
      %84 = dma.done [#allocation10], 2048
    $region41: #{tpu_custom_call.1} parent=1 // pred_fallthru
      _
    %v85 = vld [vmem:[#allocation3] sm:$0xff]
    %86 = vst [vmem:[#allocation2] sm:$0xff] 0.0
    %87 = vst [vmem:[#allocation2 + $0x8] sm:$0xff] 0.0
    %vm88 = vcmask 130048
    %89 = vst.msk [vmem:[#allocation2] sm:$0xff] %vm88, %v85
    %v90 = vand.u32 2147483647, %v85
    %vm91 = vcmp.le.f32.partialorder %v90, 0.7853982
    %vm92 = vcmp.lt.s32.totalorder %v85, 0
    %v93 = vand.u32 %v85, 2139095040
    %v94 = vshrl.u32 %v93, 23
    %v95 = vsub.s32 %v94, 127
    %v96 = vand.u32 2147483647, %v85
    %v97 = vand.u32 %v96, 8388607
    %v98 = vor.u32 %v97, 8388608
    %v99 = vsub.s32 0, %v98
    %v100 = vadd.s32 %v95, 1
    %vm101 = vcmp.gt.s32.totalorder %v100, 0
    %v102 = vsel %vm101, %v100, 0
    %v103 = vshrl.u32 %v102, 5
    %v104 = vand.u32 %v102, 31
    %v105 = vsub.s32 32, %v104
    %v106 = vshrl.u32 683565275, %v105
    %v107 = vshll.u32 683565275, %v104
    %v108 = vshrl.u32 2475754826, %v105
    %v109 = vor.u32 %v107, %v108
    %v110 = vshll.u32 2475754826, %v104
    %v111 = vshrl.u32 2131351028, %v105
    %v112 = vor.u32 %v110, %v111
    %v113 = vshll.u32 2131351028, %v104
    %v114 = vshrl.u32 2102212464, %v105
    %v115 = vor.u32 %v113, %v114
    %v116 = vshll.u32 2102212464, %v104
    %v117 = vshrl.u32 920167782, %v105
    %v118 = vor.u32 %v116, %v117
    %v119 = vshll.u32 920167782, %v104
    %v120 = vshrl.u32 1326507024, %v105
    %v121 = vor.u32 %v119, %v120
    %vm122 = vcmp.lt.s32.totalorder %v103, 1
    %vm123 = vcmp.lt.s32.totalorder %v103, 2
    %vm124 = vcmp.lt.s32.totalorder %v103, 3
    %vm125 = vcmp.lt.s32.totalorder %v103, 4
    %v126 = vsel %vm122, %v106, %v109
    %v127 = vsel %vm125, %v115, 2102212464
    %v128 = vsel %vm124, %v112, %v127
    %v129 = vsel %vm123, %v126, %v128
    %v130 = vsel %vm122, %v109, %v112
    %v131 = vsel %vm125, %v118, 920167782
    %v132 = vsel %vm124, %v115, %v131
    %v133 = vsel %vm123, %v130, %v132
    %v134 = vsel %vm122, %v112, %v115
    %v135 = vsel %vm125, %v121, 1326507024
    %v136 = vsel %vm124, %v118, %v135
    %v137 = vsel %vm123, %v134, %v136
    %v138 = vshll.u32 %v98, 8
    %v139 = vand.u32 %v138, 65535
    %v140 = vshrl.u32 %v138, 16
    %v141 = vand.u32 %v137, 65535
    %v142 = vshrl.u32 %v137, 16
    %v143 = vmul.u32 %v139, %v141
    %v144 = vmul.u32 %v139, %v142
    %v145 = vmul.u32 %v140, %v141
    %v146 = vmul.u32 %v140, %v142
    %v147 = vshll.u32 %v144, 16
    %v148 = vshrl.u32 %v144, 16
    %v149 = vshll.u32 %v145, 16
    %v150 = vshrl.u32 %v145, 16
    %vm151 = vc.u32 %v143, %v147
    %v152 = vsel %vm151, 1, 0
    %v153 = vadd.s32 %v143, %v147
    %v154 = vadd.s32 %v146, %v152
    %vm155 = vc.u32 %v153, %v149
    %v156 = vsel %vm155, 1, 0
    %v157 = vadd.s32 %v153, %v149
    %v158 = vadd.s32 %v154, %v156
    %v159 = vadd.s32 %v158, %v148
    %v160 = vadd.s32 %v159, %v150
    %v161 = vand.u32 %v138, 65535
    %v162 = vshrl.u32 %v138, 16
    %v163 = vand.u32 %v133, 65535
    %v164 = vshrl.u32 %v133, 16
    %v165 = vmul.u32 %v161, %v163
    %v166 = vmul.u32 %v161, %v164
    %v167 = vmul.u32 %v162, %v163
    %v168 = vmul.u32 %v162, %v164
    %v169 = vshll.u32 %v166, 16
    %v170 = vshrl.u32 %v166, 16
    %v171 = vshll.u32 %v167, 16
    %v172 = vshrl.u32 %v167, 16
    %vm173 = vc.u32 %v165, %v169
    %v174 = vsel %vm173, 1, 0
    %v175 = vadd.s32 %v165, %v169
    %v176 = vadd.s32 %v168, %v174
    %vm177 = vc.u32 %v175, %v171
    %v178 = vsel %vm177, 1, 0
    %v179 = vadd.s32 %v175, %v171
    %v180 = vadd.s32 %v176, %v178
    %v181 = vadd.s32 %v180, %v170
    %v182 = vadd.s32 %v181, %v172
    %v183 = vmul.u32 %v138, %v129
    %v184 = vadd.s32 %v160, %v179
    %vm185 = vc.u32 %v160, %v179
    %v186 = vadd.s32 %v182, 1
    %v187 = vsel %vm185, %v186, %v182
    %v188 = vadd.s32 %v183, %v187
    %v189 = vadd.s32 %v188, 536870912
    %v190 = vshrl.u32 %v189, 30
    %v191 = vshll.u32 %v190, 30
    %v192 = vsub.s32 %v188, %v191
    %vm193 = vcmp.lt.s32.totalorder %v192, 0
    %v194 = vsub.s32 0, %v192
    %v195 = vsel %vm193, %v194, %v192
    %v196 = vclz %v195
    %v197 = vsub.s32 %v196, 2
    %vm198 = vcmp.gt.s32.totalorder 0, %v197
    %v199 = vsel %vm198, 0, %v197
    %v200 = vsub.s32 32, %v199
    %v201 = vshll.u32 %v192, %v199
    %v202 = vshrl.u32 %v184, %v200
    %v203 = vor.u32 %v201, %v202
    %v204 = vsub.s32 4294967266, %v199
    %v205 = vadd.s32 %v204, 127
    %v206 = vshll.u32 %v205, 23
    %v207 = vor.u32 4788187, %v206
    %v208 = vand.u32 2147483647, %v207
    %v210 = vcvt.s32.f32 %v203
    %v211 = vmul.f32 %v210, %v208
    %v212 = vxor.u32 %v211, 2147483648
    %v213 = vsel %vm92, %v212, %v211
    %v214 = vsub.s32 4, %v190
    %v215 = vsel %vm92, %v214, %v190
    %v216 = vsel %vm91, %v85, %v213
    %v217 = vsel %vm91, 0, %v215
    %v218 = vmul.f32 %v216, %v216
    %v219 = vmul.f32 %v218, -0.001358992
    %v220 = vadd.f32 %v219, 0.041655596
    %v221 = vmul.f32 %v218, %v220
    %v222 = vadd.f32 %v221, -0.4999988
    %v223 = vmul.f32 %v218, %v222
    %v224 = vadd.f32 1.0, %v223
    %v225 = vmul.f32 %v216, %v216
    %v226 = vmul.f32 %v225, -0.00019511016
    %v227 = vadd.f32 %v226, 0.008332121
    %v228 = vmul.f32 %v225, %v227
    %v229 = vadd.f32 %v228, -0.16666654
    %v230 = vmul.f32 %v225, %v229
    %v231 = vadd.f32 %v230, 1.0
    %v232 = vmul.f32 %v231, %v216
    %vm233 = vweird.f32 %v85
    %v234 = vadd.s32 %v217, 3
    %v235 = vand.u32 %v234, 3
    %vm236 = vcmp.lt.s32.totalorder %v235, 2
    %vm237 = vcmp.eq.s32.totalorder %v235, 0
    %v238 = vxor.u32 %v232, 2147483648
    %v239 = vsel %vm237, %v224, %v238
    %vm240 = vcmp.eq.s32.totalorder %v235, 2
    %v241 = vxor.u32 %v224, 2147483648
    %v242 = vsel %vm240, %v241, %v232
    %v243 = vsel %vm236, %v239, %v242
    %v244 = vsel %vm233, nan, %v243
    %246 = vrot.lane.b32.xlu0 %v244, 16
    %v247 = vpop.permute.xlu0 %246
    %vm249 = vcmask 261248
    %250 = vst.msk [vmem:[#allocation2] sm:$0xff] %vm249, %v247
    %v251 = vand.u32 2147483647, %v85
    %vm252 = vcmp.le.f32.partialorder %v251, 0.7853982
    %vm253 = vcmp.lt.s32.totalorder %v85, 0
    %v254 = vand.u32 %v85, 2139095040
    %v255 = vshrl.u32 %v254, 23
    %v256 = vsub.s32 %v255, 127
    %v257 = vand.u32 2147483647, %v85
    %v258 = vand.u32 %v257, 8388607
    %v259 = vor.u32 %v258, 8388608
    %v260 = vsub.s32 0, %v259
    %v261 = vadd.s32 %v256, 1
    %vm262 = vcmp.gt.s32.totalorder %v261, 0
    %v263 = vsel %vm262, %v261, 0
    %v264 = vshrl.u32 %v263, 5
    %v265 = vand.u32 %v263, 31
    %v266 = vsub.s32 32, %v265
    %v267 = vshrl.u32 683565275, %v266
    %v268 = vshll.u32 683565275, %v265
    %v269 = vshrl.u32 2475754826, %v266
    %v270 = vor.u32 %v268, %v269
    %v271 = vshll.u32 2475754826, %v265
    %v272 = vshrl.u32 2131351028, %v266
    %v273 = vor.u32 %v271, %v272
    %v274 = vshll.u32 2131351028, %v265
    %v275 = vshrl.u32 2102212464, %v266
    %v276 = vor.u32 %v274, %v275
    %v277 = vshll.u32 2102212464, %v265
    %v278 = vshrl.u32 920167782, %v266
    %v279 = vor.u32 %v277, %v278
    %v280 = vshll.u32 920167782, %v265
    %v281 = vshrl.u32 1326507024, %v266
    %v282 = vor.u32 %v280, %v281
    %vm283 = vcmp.lt.s32.totalorder %v264, 1
    %vm284 = vcmp.lt.s32.totalorder %v264, 2
    %vm285 = vcmp.lt.s32.totalorder %v264, 3
    %vm286 = vcmp.lt.s32.totalorder %v264, 4
    %v287 = vsel %vm283, %v267, %v270
    %v288 = vsel %vm286, %v276, 2102212464
    %v289 = vsel %vm285, %v273, %v288
    %v290 = vsel %vm284, %v287, %v289
    %v291 = vsel %vm283, %v270, %v273
    %v292 = vsel %vm286, %v279, 920167782
    %v293 = vsel %vm285, %v276, %v292
    %v294 = vsel %vm284, %v291, %v293
    %v295 = vsel %vm283, %v273, %v276
    %v296 = vsel %vm286, %v282, 1326507024
    %v297 = vsel %vm285, %v279, %v296
    %v298 = vsel %vm284, %v295, %v297
    %v299 = vshll.u32 %v259, 8
    %v300 = vand.u32 %v299, 65535
    %v301 = vshrl.u32 %v299, 16
    %v302 = vand.u32 %v298, 65535
    %v303 = vshrl.u32 %v298, 16
    %v304 = vmul.u32 %v300, %v302
    %v305 = vmul.u32 %v300, %v303
    %v306 = vmul.u32 %v301, %v302
    %v307 = vmul.u32 %v301, %v303
    %v308 = vshll.u32 %v305, 16
    %v309 = vshrl.u32 %v305, 16
    %v310 = vshll.u32 %v306, 16
    %v311 = vshrl.u32 %v306, 16
    %vm312 = vc.u32 %v304, %v308
    %v313 = vsel %vm312, 1, 0
    %v314 = vadd.s32 %v304, %v308
    %v315 = vadd.s32 %v307, %v313
    %vm316 = vc.u32 %v314, %v310
    %v317 = vsel %vm316, 1, 0
    %v318 = vadd.s32 %v314, %v310
    %v319 = vadd.s32 %v315, %v317
    %v320 = vadd.s32 %v319, %v309
    %v321 = vadd.s32 %v320, %v311
    %v322 = vand.u32 %v299, 65535
    %v323 = vshrl.u32 %v299, 16
    %v324 = vand.u32 %v294, 65535
    %v325 = vshrl.u32 %v294, 16
    %v326 = vmul.u32 %v322, %v324
    %v327 = vmul.u32 %v322, %v325
    %v328 = vmul.u32 %v323, %v324
    %v329 = vmul.u32 %v323, %v325
    %v330 = vshll.u32 %v327, 16
    %v331 = vshrl.u32 %v327, 16
    %v332 = vshll.u32 %v328, 16
    %v333 = vshrl.u32 %v328, 16
    %vm334 = vc.u32 %v326, %v330
    %v335 = vsel %vm334, 1, 0
    %v336 = vadd.s32 %v326, %v330
    %v337 = vadd.s32 %v329, %v335
    %vm338 = vc.u32 %v336, %v332
    %v339 = vsel %vm338, 1, 0
    %v340 = vadd.s32 %v336, %v332
    %v341 = vadd.s32 %v337, %v339
    %v342 = vadd.s32 %v341, %v331
    %v343 = vadd.s32 %v342, %v333
    %v344 = vmul.u32 %v299, %v290
    %v345 = vadd.s32 %v321, %v340
    %vm346 = vc.u32 %v321, %v340
    %v347 = vadd.s32 %v343, 1
    %v348 = vsel %vm346, %v347, %v343
    %v349 = vadd.s32 %v344, %v348
    %v350 = vadd.s32 %v349, 536870912
    %v351 = vshrl.u32 %v350, 30
    %v352 = vshll.u32 %v351, 30
    %v353 = vsub.s32 %v349, %v352
    %vm354 = vcmp.lt.s32.totalorder %v353, 0
    %v355 = vsub.s32 0, %v353
    %v356 = vsel %vm354, %v355, %v353
    %v357 = vclz %v356
    %v358 = vsub.s32 %v357, 2
    %vm359 = vcmp.gt.s32.totalorder 0, %v358
    %v360 = vsel %vm359, 0, %v358
    %v361 = vsub.s32 32, %v360
    %v362 = vshll.u32 %v353, %v360
    %v363 = vshrl.u32 %v345, %v361
    %v364 = vor.u32 %v362, %v363
    %v365 = vsub.s32 4294967266, %v360
    %v366 = vadd.s32 %v365, 127
    %v367 = vshll.u32 %v366, 23
    %v368 = vor.u32 4788187, %v367
    %v369 = vand.u32 2147483647, %v368
    %v371 = vcvt.s32.f32 %v364
    %v372 = vmul.f32 %v371, %v369
    %v373 = vxor.u32 %v372, 2147483648
    %v374 = vsel %vm253, %v373, %v372
    %v375 = vsub.s32 4, %v351
    %v376 = vsel %vm253, %v375, %v351
    %v377 = vsel %vm252, %v85, %v374
    %v378 = vsel %vm252, 0, %v376
    %v379 = vmul.f32 %v377, %v377
    %v380 = vmul.f32 %v379, -0.001358992
    %v381 = vadd.f32 %v380, 0.041655596
    %v382 = vmul.f32 %v379, %v381
    %v383 = vadd.f32 %v382, -0.4999988
    %v384 = vmul.f32 %v379, %v383
    %v385 = vadd.f32 1.0, %v384
    %v386 = vmul.f32 %v377, %v377
    %v387 = vmul.f32 %v386, -0.00019511016
    %v388 = vadd.f32 %v387, 0.008332121
    %v389 = vmul.f32 %v386, %v388
    %v390 = vadd.f32 %v389, -0.16666654
    %v391 = vmul.f32 %v386, %v390
    %v392 = vadd.f32 %v391, 1.0
    %v393 = vmul.f32 %v392, %v377
    %vm394 = vweird.f32 %v85
    %v395 = vand.u32 %v378, 3
    %vm396 = vcmp.lt.s32.totalorder %v395, 2
    %vm397 = vcmp.eq.s32.totalorder %v395, 0
    %v398 = vxor.u32 %v393, 2147483648
    %v399 = vsel %vm397, %v385, %v398
    %vm400 = vcmp.eq.s32.totalorder %v395, 2
    %v401 = vxor.u32 %v385, 2147483648
    %v402 = vsel %vm400, %v401, %v393
    %v403 = vsel %vm396, %v399, %v402
    %v404 = vsel %vm394, nan, %v403
    %406 = vrot.lane.b32.xlu0 %v404, 80
    %v407 = vpop.permute.xlu0 %406
    %vm409 = vcmask 786048
    %410 = vst.msk [vmem:[#allocation2] sm:$0xff] %vm409, %v407
    %v411 = vmul.f32 %v85, 2.0
    %v412 = vand.u32 2147483647, %v411
    %vm413 = vcmp.le.f32.partialorder %v412, 0.7853982
    %vm414 = vcmp.lt.s32.totalorder %v411, 0
    %v415 = vand.u32 %v411, 2139095040
    %v416 = vshrl.u32 %v415, 23
    %v417 = vsub.s32 %v416, 127
    %v418 = vand.u32 2147483647, %v411
    %v419 = vand.u32 %v418, 8388607
    %v420 = vor.u32 %v419, 8388608
    %v421 = vsub.s32 0, %v420
    %v422 = vadd.s32 %v417, 1
    %vm423 = vcmp.gt.s32.totalorder %v422, 0
    %v424 = vsel %vm423, %v422, 0
    %v425 = vshrl.u32 %v424, 5
    %v426 = vand.u32 %v424, 31
    %v427 = vsub.s32 32, %v426
    %v428 = vshrl.u32 683565275, %v427
    %v429 = vshll.u32 683565275, %v426
    %v430 = vshrl.u32 2475754826, %v427
    %v431 = vor.u32 %v429, %v430
    %v432 = vshll.u32 2475754826, %v426
    %v433 = vshrl.u32 2131351028, %v427
    %v434 = vor.u32 %v432, %v433
    %v435 = vshll.u32 2131351028, %v426
    %v436 = vshrl.u32 2102212464, %v427
    %v437 = vor.u32 %v435, %v436
    %v438 = vshll.u32 2102212464, %v426
    %v439 = vshrl.u32 920167782, %v427
    %v440 = vor.u32 %v438, %v439
    %v441 = vshll.u32 920167782, %v426
    %v442 = vshrl.u32 1326507024, %v427
    %v443 = vor.u32 %v441, %v442
    %vm444 = vcmp.lt.s32.totalorder %v425, 1
    %vm445 = vcmp.lt.s32.totalorder %v425, 2
    %vm446 = vcmp.lt.s32.totalorder %v425, 3
    %vm447 = vcmp.lt.s32.totalorder %v425, 4
    %v448 = vsel %vm444, %v428, %v431
    %v449 = vsel %vm447, %v437, 2102212464
    %v450 = vsel %vm446, %v434, %v449
    %v451 = vsel %vm445, %v448, %v450
    %v452 = vsel %vm444, %v431, %v434
    %v453 = vsel %vm447, %v440, 920167782
    %v454 = vsel %vm446, %v437, %v453
    %v455 = vsel %vm445, %v452, %v454
    %v456 = vsel %vm444, %v434, %v437
    %v457 = vsel %vm447, %v443, 1326507024
    %v458 = vsel %vm446, %v440, %v457
    %v459 = vsel %vm445, %v456, %v458
    %v460 = vshll.u32 %v420, 8
    %v461 = vand.u32 %v460, 65535
    %v462 = vshrl.u32 %v460, 16
    %v463 = vand.u32 %v459, 65535
    %v464 = vshrl.u32 %v459, 16
    %v465 = vmul.u32 %v461, %v463
    %v466 = vmul.u32 %v461, %v464
    %v467 = vmul.u32 %v462, %v463
    %v468 = vmul.u32 %v462, %v464
    %v469 = vshll.u32 %v466, 16
    %v470 = vshrl.u32 %v466, 16
    %v471 = vshll.u32 %v467, 16
    %v472 = vshrl.u32 %v467, 16
    %vm473 = vc.u32 %v465, %v469
    %v474 = vsel %vm473, 1, 0
    %v475 = vadd.s32 %v465, %v469
    %v476 = vadd.s32 %v468, %v474
    %vm477 = vc.u32 %v475, %v471
    %v478 = vsel %vm477, 1, 0
    %v479 = vadd.s32 %v475, %v471
    %v480 = vadd.s32 %v476, %v478
    %v481 = vadd.s32 %v480, %v470
    %v482 = vadd.s32 %v481, %v472
    %v483 = vand.u32 %v460, 65535
    %v484 = vshrl.u32 %v460, 16
    %v485 = vand.u32 %v455, 65535
    %v486 = vshrl.u32 %v455, 16
    %v487 = vmul.u32 %v483, %v485
    %v488 = vmul.u32 %v483, %v486
    %v489 = vmul.u32 %v484, %v485
    %v490 = vmul.u32 %v484, %v486
    %v491 = vshll.u32 %v488, 16
    %v492 = vshrl.u32 %v488, 16
    %v493 = vshll.u32 %v489, 16
    %v494 = vshrl.u32 %v489, 16
    %vm495 = vc.u32 %v487, %v491
    %v496 = vsel %vm495, 1, 0
    %v497 = vadd.s32 %v487, %v491
    %v498 = vadd.s32 %v490, %v496
    %vm499 = vc.u32 %v497, %v493
    %v500 = vsel %vm499, 1, 0
    %v501 = vadd.s32 %v497, %v493
    %v502 = vadd.s32 %v498, %v500
    %v503 = vadd.s32 %v502, %v492
    %v504 = vadd.s32 %v503, %v494
    %v505 = vmul.u32 %v460, %v451
    %v506 = vadd.s32 %v482, %v501
    %vm507 = vc.u32 %v482, %v501
    %v508 = vadd.s32 %v504, 1
    %v509 = vsel %vm507, %v508, %v504
    %v510 = vadd.s32 %v505, %v509
    %v511 = vadd.s32 %v510, 536870912
    %v512 = vshrl.u32 %v511, 30
    %v513 = vshll.u32 %v512, 30
    %v514 = vsub.s32 %v510, %v513
    %vm515 = vcmp.lt.s32.totalorder %v514, 0
    %v516 = vsub.s32 0, %v514
    %v517 = vsel %vm515, %v516, %v514
    %v518 = vclz %v517
    %v519 = vsub.s32 %v518, 2
    %vm520 = vcmp.gt.s32.totalorder 0, %v519
    %v521 = vsel %vm520, 0, %v519
    %v522 = vsub.s32 32, %v521
    %v523 = vshll.u32 %v514, %v521
    %v524 = vshrl.u32 %v506, %v522
    %v525 = vor.u32 %v523, %v524
    %v526 = vsub.s32 4294967266, %v521
    %v527 = vadd.s32 %v526, 127
    %v528 = vshll.u32 %v527, 23
    %v529 = vor.u32 4788187, %v528
    %v530 = vand.u32 2147483647, %v529
    %v532 = vcvt.s32.f32 %v525
    %v533 = vmul.f32 %v532, %v530
    %v534 = vxor.u32 %v533, 2147483648
    %v535 = vsel %vm414, %v534, %v533
    %v536 = vsub.s32 4, %v512
    %v537 = vsel %vm414, %v536, %v512
    %v538 = vsel %vm413, %v411, %v535
    %v539 = vsel %vm413, 0, %v537
    %v540 = vmul.f32 %v538, %v538
    %v541 = vmul.f32 %v540, -0.001358992
    %v542 = vadd.f32 %v541, 0.041655596
    %v543 = vmul.f32 %v540, %v542
    %v544 = vadd.f32 %v543, -0.4999988
    %v545 = vmul.f32 %v540, %v544
    %v546 = vadd.f32 1.0, %v545
    %v547 = vmul.f32 %v538, %v538
    %v548 = vmul.f32 %v547, -0.00019511016
    %v549 = vadd.f32 %v548, 0.008332121
    %v550 = vmul.f32 %v547, %v549
    %v551 = vadd.f32 %v550, -0.16666654
    %v552 = vmul.f32 %v547, %v551
    %v553 = vadd.f32 %v552, 1.0
    %v554 = vmul.f32 %v553, %v538
    %vm555 = vweird.f32 %v411
    %v556 = vadd.s32 %v539, 3
    %v557 = vand.u32 %v556, 3
    %vm558 = vcmp.lt.s32.totalorder %v557, 2
    %vm559 = vcmp.eq.s32.totalorder %v557, 0
    %v560 = vxor.u32 %v554, 2147483648
    %v561 = vsel %vm559, %v546, %v560
    %vm562 = vcmp.eq.s32.totalorder %v557, 2
    %v563 = vxor.u32 %v546, 2147483648
    %v564 = vsel %vm562, %v563, %v554
    %v565 = vsel %vm558, %v561, %v564
    %v566 = vsel %vm555, nan, %v565
    %568 = vrot.lane.b32.xlu0 %v566, 32
    %v569 = vpop.permute.xlu0 %568
    %vm571 = vcmask 392448
    %572 = vst.msk [vmem:[#allocation2] sm:$0xff] %vm571, %v569
    %v573 = vand.u32 2147483647, %v411
    %vm574 = vcmp.le.f32.partialorder %v573, 0.7853982
    %vm575 = vcmp.lt.s32.totalorder %v411, 0
    %v576 = vand.u32 %v411, 2139095040
    %v577 = vshrl.u32 %v576, 23
    %v578 = vsub.s32 %v577, 127
    %v579 = vand.u32 2147483647, %v411
    %v580 = vand.u32 %v579, 8388607
    %v581 = vor.u32 %v580, 8388608
    %v582 = vsub.s32 0, %v581
    %v583 = vadd.s32 %v578, 1
    %vm584 = vcmp.gt.s32.totalorder %v583, 0
    %v585 = vsel %vm584, %v583, 0
    %v586 = vshrl.u32 %v585, 5
    %v587 = vand.u32 %v585, 31
    %v588 = vsub.s32 32, %v587
    %v589 = vshrl.u32 683565275, %v588
    %v590 = vshll.u32 683565275, %v587
    %v591 = vshrl.u32 2475754826, %v588
    %v592 = vor.u32 %v590, %v591
    %v593 = vshll.u32 2475754826, %v587
    %v594 = vshrl.u32 2131351028, %v588
    %v595 = vor.u32 %v593, %v594
    %v596 = vshll.u32 2131351028, %v587
    %v597 = vshrl.u32 2102212464, %v588
    %v598 = vor.u32 %v596, %v597
    %v599 = vshll.u32 2102212464, %v587
    %v600 = vshrl.u32 920167782, %v588
    %v601 = vor.u32 %v599, %v600
    %v602 = vshll.u32 920167782, %v587
    %v603 = vshrl.u32 1326507024, %v588
    %v604 = vor.u32 %v602, %v603
    %vm605 = vcmp.lt.s32.totalorder %v586, 1
    %vm606 = vcmp.lt.s32.totalorder %v586, 2
    %vm607 = vcmp.lt.s32.totalorder %v586, 3
    %vm608 = vcmp.lt.s32.totalorder %v586, 4
    %v609 = vsel %vm605, %v589, %v592
    %v610 = vsel %vm608, %v598, 2102212464
    %v611 = vsel %vm607, %v595, %v610
    %v612 = vsel %vm606, %v609, %v611
    %v613 = vsel %vm605, %v592, %v595
    %v614 = vsel %vm608, %v601, 920167782
    %v615 = vsel %vm607, %v598, %v614
    %v616 = vsel %vm606, %v613, %v615
    %v617 = vsel %vm605, %v595, %v598
    %v618 = vsel %vm608, %v604, 1326507024
    %v619 = vsel %vm607, %v601, %v618
    %v620 = vsel %vm606, %v617, %v619
    %v621 = vshll.u32 %v581, 8
    %v622 = vand.u32 %v621, 65535
    %v623 = vshrl.u32 %v621, 16
    %v624 = vand.u32 %v620, 65535
    %v625 = vshrl.u32 %v620, 16
    %v626 = vmul.u32 %v622, %v624
    %v627 = vmul.u32 %v622, %v625
    %v628 = vmul.u32 %v623, %v624
    %v629 = vmul.u32 %v623, %v625
    %v630 = vshll.u32 %v627, 16
    %v631 = vshrl.u32 %v627, 16
    %v632 = vshll.u32 %v628, 16
    %v633 = vshrl.u32 %v628, 16
    %vm634 = vc.u32 %v626, %v630
    %v635 = vsel %vm634, 1, 0
    %v636 = vadd.s32 %v626, %v630
    %v637 = vadd.s32 %v629, %v635
    %vm638 = vc.u32 %v636, %v632
    %v639 = vsel %vm638, 1, 0
    %v640 = vadd.s32 %v636, %v632
    %v641 = vadd.s32 %v637, %v639
    %v642 = vadd.s32 %v641, %v631
    %v643 = vadd.s32 %v642, %v633
    %v644 = vand.u32 %v621, 65535
    %v645 = vshrl.u32 %v621, 16
    %v646 = vand.u32 %v616, 65535
    %v647 = vshrl.u32 %v616, 16
    %v648 = vmul.u32 %v644, %v646
    %v649 = vmul.u32 %v644, %v647
    %v650 = vmul.u32 %v645, %v646
    %v651 = vmul.u32 %v645, %v647
    %v652 = vshll.u32 %v649, 16
    %v653 = vshrl.u32 %v649, 16
    %v654 = vshll.u32 %v650, 16
    %v655 = vshrl.u32 %v650, 16
    %vm656 = vc.u32 %v648, %v652
    %v657 = vsel %vm656, 1, 0
    %v658 = vadd.s32 %v648, %v652
    %v659 = vadd.s32 %v651, %v657
    %vm660 = vc.u32 %v658, %v654
    %v661 = vsel %vm660, 1, 0
    %v662 = vadd.s32 %v658, %v654
    %v663 = vadd.s32 %v659, %v661
    %v664 = vadd.s32 %v663, %v653
    %v665 = vadd.s32 %v664, %v655
    %v666 = vmul.u32 %v621, %v612
    %v667 = vadd.s32 %v643, %v662
    %vm668 = vc.u32 %v643, %v662
    %v669 = vadd.s32 %v665, 1
    %v670 = vsel %vm668, %v669, %v665
    %v671 = vadd.s32 %v666, %v670
    %v672 = vadd.s32 %v671, 536870912
    %v673 = vshrl.u32 %v672, 30
    %v674 = vshll.u32 %v673, 30
    %v675 = vsub.s32 %v671, %v674
    %vm676 = vcmp.lt.s32.totalorder %v675, 0
    %v677 = vsub.s32 0, %v675
    %v678 = vsel %vm676, %v677, %v675
    %v679 = vclz %v678
    %v680 = vsub.s32 %v679, 2
    %vm681 = vcmp.gt.s32.totalorder 0, %v680
    %v682 = vsel %vm681, 0, %v680
    %v683 = vsub.s32 32, %v682
    %v684 = vshll.u32 %v675, %v682
    %v685 = vshrl.u32 %v667, %v683
    %v686 = vor.u32 %v684, %v685
    %v687 = vsub.s32 4294967266, %v682
    %v688 = vadd.s32 %v687, 127
    %v689 = vshll.u32 %v688, 23
    %v690 = vor.u32 4788187, %v689
    %v691 = vand.u32 2147483647, %v690
    %v693 = vcvt.s32.f32 %v686
    %v694 = vmul.f32 %v693, %v691
    %v695 = vxor.u32 %v694, 2147483648
    %v696 = vsel %vm575, %v695, %v694
    %v697 = vsub.s32 4, %v673
    %v698 = vsel %vm575, %v697, %v673
    %v699 = vsel %vm574, %v411, %v696
    %v700 = vsel %vm574, 0, %v698
    %v701 = vmul.f32 %v699, %v699
    %v702 = vmul.f32 %v701, -0.001358992
    %v703 = vadd.f32 %v702, 0.041655596
    %v704 = vmul.f32 %v701, %v703
    %v705 = vadd.f32 %v704, -0.4999988
    %v706 = vmul.f32 %v701, %v705
    %v707 = vadd.f32 1.0, %v706
    %v708 = vmul.f32 %v699, %v699
    %v709 = vmul.f32 %v708, -0.00019511016
    %v710 = vadd.f32 %v709, 0.008332121
    %v711 = vmul.f32 %v708, %v710
    %v712 = vadd.f32 %v711, -0.16666654
    %v713 = vmul.f32 %v708, %v712
    %v714 = vadd.f32 %v713, 1.0
    %v715 = vmul.f32 %v714, %v699
    %vm716 = vweird.f32 %v411
    %v717 = vand.u32 %v700, 3
    %vm718 = vcmp.lt.s32.totalorder %v717, 2
    %vm719 = vcmp.eq.s32.totalorder %v717, 0
    %v720 = vxor.u32 %v715, 2147483648
    %v721 = vsel %vm719, %v707, %v720
    %vm722 = vcmp.eq.s32.totalorder %v717, 2
    %v723 = vxor.u32 %v707, 2147483648
    %v724 = vsel %vm722, %v723, %v715
    %v725 = vsel %vm718, %v721, %v724
    %v726 = vsel %vm716, nan, %v725
    %728 = vrot.lane.b32.xlu0 %v726, 96
    %v729 = vpop.permute.xlu0 %728
    %vm731 = vcmask 917248
    %732 = vst.msk [vmem:[#allocation2] sm:$0xff] %vm731, %v729
    %v733 = vmul.f32 %v85, 4.0
    %v734 = vand.u32 2147483647, %v733
    %vm735 = vcmp.le.f32.partialorder %v734, 0.7853982
    %vm736 = vcmp.lt.s32.totalorder %v733, 0
    %v737 = vand.u32 %v733, 2139095040
    %v738 = vshrl.u32 %v737, 23
    %v739 = vsub.s32 %v738, 127
    %v740 = vand.u32 2147483647, %v733
    %v741 = vand.u32 %v740, 8388607
    %v742 = vor.u32 %v741, 8388608
    %v743 = vsub.s32 0, %v742
    %v744 = vadd.s32 %v739, 1
    %vm745 = vcmp.gt.s32.totalorder %v744, 0
    %v746 = vsel %vm745, %v744, 0
    %v747 = vshrl.u32 %v746, 5
    %v748 = vand.u32 %v746, 31
    %v749 = vsub.s32 32, %v748
    %v750 = vshrl.u32 683565275, %v749
    %v751 = vshll.u32 683565275, %v748
    %v752 = vshrl.u32 2475754826, %v749
    %v753 = vor.u32 %v751, %v752
    %v754 = vshll.u32 2475754826, %v748
    %v755 = vshrl.u32 2131351028, %v749
    %v756 = vor.u32 %v754, %v755
    %v757 = vshll.u32 2131351028, %v748
    %v758 = vshrl.u32 2102212464, %v749
    %v759 = vor.u32 %v757, %v758
    %v760 = vshll.u32 2102212464, %v748
    %v761 = vshrl.u32 920167782, %v749
    %v762 = vor.u32 %v760, %v761
    %v763 = vshll.u32 920167782, %v748
    %v764 = vshrl.u32 1326507024, %v749
    %v765 = vor.u32 %v763, %v764
    %vm766 = vcmp.lt.s32.totalorder %v747, 1
    %vm767 = vcmp.lt.s32.totalorder %v747, 2
    %vm768 = vcmp.lt.s32.totalorder %v747, 3
    %vm769 = vcmp.lt.s32.totalorder %v747, 4
    %v770 = vsel %vm766, %v750, %v753
    %v771 = vsel %vm769, %v759, 2102212464
    %v772 = vsel %vm768, %v756, %v771
    %v773 = vsel %vm767, %v770, %v772
    %v774 = vsel %vm766, %v753, %v756
    %v775 = vsel %vm769, %v762, 920167782
    %v776 = vsel %vm768, %v759, %v775
    %v777 = vsel %vm767, %v774, %v776
    %v778 = vsel %vm766, %v756, %v759
    %v779 = vsel %vm769, %v765, 1326507024
    %v780 = vsel %vm768, %v762, %v779
    %v781 = vsel %vm767, %v778, %v780
    %v782 = vshll.u32 %v742, 8
    %v783 = vand.u32 %v782, 65535
    %v784 = vshrl.u32 %v782, 16
    %v785 = vand.u32 %v781, 65535
    %v786 = vshrl.u32 %v781, 16
    %v787 = vmul.u32 %v783, %v785
    %v788 = vmul.u32 %v783, %v786
    %v789 = vmul.u32 %v784, %v785
    %v790 = vmul.u32 %v784, %v786
    %v791 = vshll.u32 %v788, 16
    %v792 = vshrl.u32 %v788, 16
    %v793 = vshll.u32 %v789, 16
    %v794 = vshrl.u32 %v789, 16
    %vm795 = vc.u32 %v787, %v791
    %v796 = vsel %vm795, 1, 0
    %v797 = vadd.s32 %v787, %v791
    %v798 = vadd.s32 %v790, %v796
    %vm799 = vc.u32 %v797, %v793
    %v800 = vsel %vm799, 1, 0
    %v801 = vadd.s32 %v797, %v793
    %v802 = vadd.s32 %v798, %v800
    %v803 = vadd.s32 %v802, %v792
    %v804 = vadd.s32 %v803, %v794
    %v805 = vand.u32 %v782, 65535
    %v806 = vshrl.u32 %v782, 16
    %v807 = vand.u32 %v777, 65535
    %v808 = vshrl.u32 %v777, 16
    %v809 = vmul.u32 %v805, %v807
    %v810 = vmul.u32 %v805, %v808
    %v811 = vmul.u32 %v806, %v807
    %v812 = vmul.u32 %v806, %v808
    %v813 = vshll.u32 %v810, 16
    %v814 = vshrl.u32 %v810, 16
    %v815 = vshll.u32 %v811, 16
    %v816 = vshrl.u32 %v811, 16
    %vm817 = vc.u32 %v809, %v813
    %v818 = vsel %vm817, 1, 0
    %v819 = vadd.s32 %v809, %v813
    %v820 = vadd.s32 %v812, %v818
    %vm821 = vc.u32 %v819, %v815
    %v822 = vsel %vm821, 1, 0
    %v823 = vadd.s32 %v819, %v815
    %v824 = vadd.s32 %v820, %v822
    %v825 = vadd.s32 %v824, %v814
    %v826 = vadd.s32 %v825, %v816
    %v827 = vmul.u32 %v782, %v773
    %v828 = vadd.s32 %v804, %v823
    %vm829 = vc.u32 %v804, %v823
    %v830 = vadd.s32 %v826, 1
    %v831 = vsel %vm829, %v830, %v826
    %v832 = vadd.s32 %v827, %v831
    %v833 = vadd.s32 %v832, 536870912
    %v834 = vshrl.u32 %v833, 30
    %v835 = vshll.u32 %v834, 30
    %v836 = vsub.s32 %v832, %v835
    %vm837 = vcmp.lt.s32.totalorder %v836, 0
    %v838 = vsub.s32 0, %v836
    %v839 = vsel %vm837, %v838, %v836
    %v840 = vclz %v839
    %v841 = vsub.s32 %v840, 2
    %vm842 = vcmp.gt.s32.totalorder 0, %v841
    %v843 = vsel %vm842, 0, %v841
    %v844 = vsub.s32 32, %v843
    %v845 = vshll.u32 %v836, %v843
    %v846 = vshrl.u32 %v828, %v844
    %v847 = vor.u32 %v845, %v846
    %v848 = vsub.s32 4294967266, %v843
    %v849 = vadd.s32 %v848, 127
    %v850 = vshll.u32 %v849, 23
    %v851 = vor.u32 4788187, %v850
    %v852 = vand.u32 2147483647, %v851
    %v854 = vcvt.s32.f32 %v847
    %v855 = vmul.f32 %v854, %v852
    %v856 = vxor.u32 %v855, 2147483648
    %v857 = vsel %vm736, %v856, %v855
    %v858 = vsub.s32 4, %v834
    %v859 = vsel %vm736, %v858, %v834
    %v860 = vsel %vm735, %v733, %v857
    %v861 = vsel %vm735, 0, %v859
    %v862 = vmul.f32 %v860, %v860
    %v863 = vmul.f32 %v862, -0.001358992
    %v864 = vadd.f32 %v863, 0.041655596
    %v865 = vmul.f32 %v862, %v864
    %v866 = vadd.f32 %v865, -0.4999988
    %v867 = vmul.f32 %v862, %v866
    %v868 = vadd.f32 1.0, %v867
    %v869 = vmul.f32 %v860, %v860
    %v870 = vmul.f32 %v869, -0.00019511016
    %v871 = vadd.f32 %v870, 0.008332121
    %v872 = vmul.f32 %v869, %v871
    %v873 = vadd.f32 %v872, -0.16666654
    %v874 = vmul.f32 %v869, %v873
    %v875 = vadd.f32 %v874, 1.0
    %v876 = vmul.f32 %v875, %v860
    %vm877 = vweird.f32 %v733
    %v878 = vadd.s32 %v861, 3
    %v879 = vand.u32 %v878, 3
    %vm880 = vcmp.lt.s32.totalorder %v879, 2
    %vm881 = vcmp.eq.s32.totalorder %v879, 0
    %v882 = vxor.u32 %v876, 2147483648
    %v883 = vsel %vm881, %v868, %v882
    %vm884 = vcmp.eq.s32.totalorder %v879, 2
    %v885 = vxor.u32 %v868, 2147483648
    %v886 = vsel %vm884, %v885, %v876
    %v887 = vsel %vm880, %v883, %v886
    %v888 = vsel %vm877, nan, %v887
    %890 = vrot.lane.b32.xlu0 %v888, 48
    %v891 = vpop.permute.xlu0 %890
    %vm893 = vcmask 523648
    %894 = vst.msk [vmem:[#allocation2] sm:$0xff] %vm893, %v891
    %v895 = vand.u32 2147483647, %v733
    %vm896 = vcmp.le.f32.partialorder %v895, 0.7853982
    %vm897 = vcmp.lt.s32.totalorder %v733, 0
    %v898 = vand.u32 %v733, 2139095040
    %v899 = vshrl.u32 %v898, 23
    %v900 = vsub.s32 %v899, 127
    %v901 = vand.u32 2147483647, %v733
    %v902 = vand.u32 %v901, 8388607
    %v903 = vor.u32 %v902, 8388608
    %v904 = vsub.s32 0, %v903
    %v905 = vadd.s32 %v900, 1
    %vm906 = vcmp.gt.s32.totalorder %v905, 0
    %v907 = vsel %vm906, %v905, 0
    %v908 = vshrl.u32 %v907, 5
    %v909 = vand.u32 %v907, 31
    %v910 = vsub.s32 32, %v909
    %v911 = vshrl.u32 683565275, %v910
    %v912 = vshll.u32 683565275, %v909
    %v913 = vshrl.u32 2475754826, %v910
    %v914 = vor.u32 %v912, %v913
    %v915 = vshll.u32 2475754826, %v909
    %v916 = vshrl.u32 2131351028, %v910
    %v917 = vor.u32 %v915, %v916
    %v918 = vshll.u32 2131351028, %v909
    %v919 = vshrl.u32 2102212464, %v910
    %v920 = vor.u32 %v918, %v919
    %v921 = vshll.u32 2102212464, %v909
    %v922 = vshrl.u32 920167782, %v910
    %v923 = vor.u32 %v921, %v922
    %v924 = vshll.u32 920167782, %v909
    %v925 = vshrl.u32 1326507024, %v910
    %v926 = vor.u32 %v924, %v925
    %vm927 = vcmp.lt.s32.totalorder %v908, 1
    %vm928 = vcmp.lt.s32.totalorder %v908, 2
    %vm929 = vcmp.lt.s32.totalorder %v908, 3
    %vm930 = vcmp.lt.s32.totalorder %v908, 4
    %v931 = vsel %vm927, %v911, %v914
    %v932 = vsel %vm930, %v920, 2102212464
    %v933 = vsel %vm929, %v917, %v932
    %v934 = vsel %vm928, %v931, %v933
    %v935 = vsel %vm927, %v914, %v917
    %v936 = vsel %vm930, %v923, 920167782
    %v937 = vsel %vm929, %v920, %v936
    %v938 = vsel %vm928, %v935, %v937
    %v939 = vsel %vm927, %v917, %v920
    %v940 = vsel %vm930, %v926, 1326507024
    %v941 = vsel %vm929, %v923, %v940
    %v942 = vsel %vm928, %v939, %v941
    %v943 = vshll.u32 %v903, 8
    %v944 = vand.u32 %v943, 65535
    %v945 = vshrl.u32 %v943, 16
    %v946 = vand.u32 %v942, 65535
    %v947 = vshrl.u32 %v942, 16
    %v948 = vmul.u32 %v944, %v946
    %v949 = vmul.u32 %v944, %v947
    %v950 = vmul.u32 %v945, %v946
    %v951 = vmul.u32 %v945, %v947
    %v952 = vshll.u32 %v949, 16
    %v953 = vshrl.u32 %v949, 16
    %v954 = vshll.u32 %v950, 16
    %v955 = vshrl.u32 %v950, 16
    %vm956 = vc.u32 %v948, %v952
    %v957 = vsel %vm956, 1, 0
    %v958 = vadd.s32 %v948, %v952
    %v959 = vadd.s32 %v951, %v957
    %vm960 = vc.u32 %v958, %v954
    %v961 = vsel %vm960, 1, 0
    %v962 = vadd.s32 %v958, %v954
    %v963 = vadd.s32 %v959, %v961
    %v964 = vadd.s32 %v963, %v953
    %v965 = vadd.s32 %v964, %v955
    %v966 = vand.u32 %v943, 65535
    %v967 = vshrl.u32 %v943, 16
    %v968 = vand.u32 %v938, 65535
    %v969 = vshrl.u32 %v938, 16
    %v970 = vmul.u32 %v966, %v968
    %v971 = vmul.u32 %v966, %v969
    %v972 = vmul.u32 %v967, %v968
    %v973 = vmul.u32 %v967, %v969
    %v974 = vshll.u32 %v971, 16
    %v975 = vshrl.u32 %v971, 16
    %v976 = vshll.u32 %v972, 16
    %v977 = vshrl.u32 %v972, 16
    %vm978 = vc.u32 %v970, %v974
    %v979 = vsel %vm978, 1, 0
    %v980 = vadd.s32 %v970, %v974
    %v981 = vadd.s32 %v973, %v979
    %vm982 = vc.u32 %v980, %v976
    %v983 = vsel %vm982, 1, 0
    %v984 = vadd.s32 %v980, %v976
    %v985 = vadd.s32 %v981, %v983
    %v986 = vadd.s32 %v985, %v975
    %v987 = vadd.s32 %v986, %v977
    %v988 = vmul.u32 %v943, %v934
    %v989 = vadd.s32 %v965, %v984
    %vm990 = vc.u32 %v965, %v984
    %v991 = vadd.s32 %v987, 1
    %v992 = vsel %vm990, %v991, %v987
    %v993 = vadd.s32 %v988, %v992
    %v994 = vadd.s32 %v993, 536870912
    %v995 = vshrl.u32 %v994, 30
    %v996 = vshll.u32 %v995, 30
    %v997 = vsub.s32 %v993, %v996
    %vm998 = vcmp.lt.s32.totalorder %v997, 0
    %v999 = vsub.s32 0, %v997
    %v1000 = vsel %vm998, %v999, %v997
    %v1001 = vclz %v1000
    %v1002 = vsub.s32 %v1001, 2
    %vm1003 = vcmp.gt.s32.totalorder 0, %v1002
    %v1004 = vsel %vm1003, 0, %v1002
    %v1005 = vsub.s32 32, %v1004
    %v1006 = vshll.u32 %v997, %v1004
    %v1007 = vshrl.u32 %v989, %v1005
    %v1008 = vor.u32 %v1006, %v1007
    %v1009 = vsub.s32 4294967266, %v1004
    %v1010 = vadd.s32 %v1009, 127
    %v1011 = vshll.u32 %v1010, 23
    %v1012 = vor.u32 4788187, %v1011
    %v1013 = vand.u32 2147483647, %v1012
    %v1015 = vcvt.s32.f32 %v1008
    %v1016 = vmul.f32 %v1015, %v1013
    %v1017 = vxor.u32 %v1016, 2147483648
    %v1018 = vsel %vm897, %v1017, %v1016
    %v1019 = vsub.s32 4, %v995
    %v1020 = vsel %vm897, %v1019, %v995
    %v1021 = vsel %vm896, %v733, %v1018
    %v1022 = vsel %vm896, 0, %v1020
    %v1023 = vmul.f32 %v1021, %v1021
    %v1024 = vmul.f32 %v1023, -0.001358992
    %v1025 = vadd.f32 %v1024, 0.041655596
    %v1026 = vmul.f32 %v1023, %v1025
    %v1027 = vadd.f32 %v1026, -0.4999988
    %v1028 = vmul.f32 %v1023, %v1027
    %v1029 = vadd.f32 1.0, %v1028
    %v1030 = vmul.f32 %v1021, %v1021
    %v1031 = vmul.f32 %v1030, -0.00019511016
    %v1032 = vadd.f32 %v1031, 0.008332121
    %v1033 = vmul.f32 %v1030, %v1032
    %v1034 = vadd.f32 %v1033, -0.16666654
    %v1035 = vmul.f32 %v1030, %v1034
    %v1036 = vadd.f32 %v1035, 1.0
    %v1037 = vmul.f32 %v1036, %v1021
    %vm1038 = vweird.f32 %v733
    %v1039 = vand.u32 %v1022, 3
    %vm1040 = vcmp.lt.s32.totalorder %v1039, 2
    %vm1041 = vcmp.eq.s32.totalorder %v1039, 0
    %v1042 = vxor.u32 %v1037, 2147483648
    %v1043 = vsel %vm1041, %v1029, %v1042
    %vm1044 = vcmp.eq.s32.totalorder %v1039, 2
    %v1045 = vxor.u32 %v1029, 2147483648
    %v1046 = vsel %vm1044, %v1045, %v1037
    %v1047 = vsel %vm1040, %v1043, %v1046
    %v1048 = vsel %vm1038, nan, %v1047
    %1050 = vrot.lane.b32.xlu0 %v1048, 112
    %v1051 = vpop.permute.xlu0 %1050
    %vm1053 = vcmask 1048448
    %1054 = vst.msk [vmem:[#allocation2] sm:$0xff] %vm1053, %v1051
    %v1055 = vmul.f32 %v85, 8.0
    %v1056 = vand.u32 2147483647, %v1055
    %vm1057 = vcmp.le.f32.partialorder %v1056, 0.7853982
    %vm1058 = vcmp.lt.s32.totalorder %v1055, 0
    %v1059 = vand.u32 %v1055, 2139095040
    %v1060 = vshrl.u32 %v1059, 23
    %v1061 = vsub.s32 %v1060, 127
    %v1062 = vand.u32 2147483647, %v1055
    %v1063 = vand.u32 %v1062, 8388607
    %v1064 = vor.u32 %v1063, 8388608
    %v1065 = vsub.s32 0, %v1064
    %v1066 = vadd.s32 %v1061, 1
    %vm1067 = vcmp.gt.s32.totalorder %v1066, 0
    %v1068 = vsel %vm1067, %v1066, 0
    %v1069 = vshrl.u32 %v1068, 5
    %v1070 = vand.u32 %v1068, 31
    %v1071 = vsub.s32 32, %v1070
    %v1072 = vshrl.u32 683565275, %v1071
    %v1073 = vshll.u32 683565275, %v1070
    %v1074 = vshrl.u32 2475754826, %v1071
    %v1075 = vor.u32 %v1073, %v1074
    %v1076 = vshll.u32 2475754826, %v1070
    %v1077 = vshrl.u32 2131351028, %v1071
    %v1078 = vor.u32 %v1076, %v1077
    %v1079 = vshll.u32 2131351028, %v1070
    %v1080 = vshrl.u32 2102212464, %v1071
    %v1081 = vor.u32 %v1079, %v1080
    %v1082 = vshll.u32 2102212464, %v1070
    %v1083 = vshrl.u32 920167782, %v1071
    %v1084 = vor.u32 %v1082, %v1083
    %v1085 = vshll.u32 920167782, %v1070
    %v1086 = vshrl.u32 1326507024, %v1071
    %v1087 = vor.u32 %v1085, %v1086
    %vm1088 = vcmp.lt.s32.totalorder %v1069, 1
    %vm1089 = vcmp.lt.s32.totalorder %v1069, 2
    %vm1090 = vcmp.lt.s32.totalorder %v1069, 3
    %vm1091 = vcmp.lt.s32.totalorder %v1069, 4
    %v1092 = vsel %vm1088, %v1072, %v1075
    %v1093 = vsel %vm1091, %v1081, 2102212464
    %v1094 = vsel %vm1090, %v1078, %v1093
    %v1095 = vsel %vm1089, %v1092, %v1094
    %v1096 = vsel %vm1088, %v1075, %v1078
    %v1097 = vsel %vm1091, %v1084, 920167782
    %v1098 = vsel %vm1090, %v1081, %v1097
    %v1099 = vsel %vm1089, %v1096, %v1098
    %v1100 = vsel %vm1088, %v1078, %v1081
    %v1101 = vsel %vm1091, %v1087, 1326507024
    %v1102 = vsel %vm1090, %v1084, %v1101
    %v1103 = vsel %vm1089, %v1100, %v1102
    %v1104 = vshll.u32 %v1064, 8
    %v1105 = vand.u32 %v1104, 65535
    %v1106 = vshrl.u32 %v1104, 16
    %v1107 = vand.u32 %v1103, 65535
    %v1108 = vshrl.u32 %v1103, 16
    %v1109 = vmul.u32 %v1105, %v1107
    %v1110 = vmul.u32 %v1105, %v1108
    %v1111 = vmul.u32 %v1106, %v1107
    %v1112 = vmul.u32 %v1106, %v1108
    %v1113 = vshll.u32 %v1110, 16
    %v1114 = vshrl.u32 %v1110, 16
    %v1115 = vshll.u32 %v1111, 16
    %v1116 = vshrl.u32 %v1111, 16
    %vm1117 = vc.u32 %v1109, %v1113
    %v1118 = vsel %vm1117, 1, 0
    %v1119 = vadd.s32 %v1109, %v1113
    %v1120 = vadd.s32 %v1112, %v1118
    %vm1121 = vc.u32 %v1119, %v1115
    %v1122 = vsel %vm1121, 1, 0
    %v1123 = vadd.s32 %v1119, %v1115
    %v1124 = vadd.s32 %v1120, %v1122
    %v1125 = vadd.s32 %v1124, %v1114
    %v1126 = vadd.s32 %v1125, %v1116
    %v1127 = vand.u32 %v1104, 65535
    %v1128 = vshrl.u32 %v1104, 16
    %v1129 = vand.u32 %v1099, 65535
    %v1130 = vshrl.u32 %v1099, 16
    %v1131 = vmul.u32 %v1127, %v1129
    %v1132 = vmul.u32 %v1127, %v1130
    %v1133 = vmul.u32 %v1128, %v1129
    %v1134 = vmul.u32 %v1128, %v1130
    %v1135 = vshll.u32 %v1132, 16
    %v1136 = vshrl.u32 %v1132, 16
    %v1137 = vshll.u32 %v1133, 16
    %v1138 = vshrl.u32 %v1133, 16
    %vm1139 = vc.u32 %v1131, %v1135
    %v1140 = vsel %vm1139, 1, 0
    %v1141 = vadd.s32 %v1131, %v1135
    %v1142 = vadd.s32 %v1134, %v1140
    %vm1143 = vc.u32 %v1141, %v1137
    %v1144 = vsel %vm1143, 1, 0
    %v1145 = vadd.s32 %v1141, %v1137
    %v1146 = vadd.s32 %v1142, %v1144
    %v1147 = vadd.s32 %v1146, %v1136
    %v1148 = vadd.s32 %v1147, %v1138
    %v1149 = vmul.u32 %v1104, %v1095
    %v1150 = vadd.s32 %v1126, %v1145
    %vm1151 = vc.u32 %v1126, %v1145
    %v1152 = vadd.s32 %v1148, 1
    %v1153 = vsel %vm1151, %v1152, %v1148
    %v1154 = vadd.s32 %v1149, %v1153
    %v1155 = vadd.s32 %v1154, 536870912
    %v1156 = vshrl.u32 %v1155, 30
    %v1157 = vshll.u32 %v1156, 30
    %v1158 = vsub.s32 %v1154, %v1157
    %vm1159 = vcmp.lt.s32.totalorder %v1158, 0
    %v1160 = vsub.s32 0, %v1158
    %v1161 = vsel %vm1159, %v1160, %v1158
    %v1162 = vclz %v1161
    %v1163 = vsub.s32 %v1162, 2
    %vm1164 = vcmp.gt.s32.totalorder 0, %v1163
    %v1165 = vsel %vm1164, 0, %v1163
    %v1166 = vsub.s32 32, %v1165
    %v1167 = vshll.u32 %v1158, %v1165
    %v1168 = vshrl.u32 %v1150, %v1166
    %v1169 = vor.u32 %v1167, %v1168
    %v1170 = vsub.s32 4294967266, %v1165
    %v1171 = vadd.s32 %v1170, 127
    %v1172 = vshll.u32 %v1171, 23
    %v1173 = vor.u32 4788187, %v1172
    %v1174 = vand.u32 2147483647, %v1173
    %v1176 = vcvt.s32.f32 %v1169
    %v1177 = vmul.f32 %v1176, %v1174
    %v1178 = vxor.u32 %v1177, 2147483648
    %v1179 = vsel %vm1058, %v1178, %v1177
    %v1180 = vsub.s32 4, %v1156
    %v1181 = vsel %vm1058, %v1180, %v1156
    %v1182 = vsel %vm1057, %v1055, %v1179
    %v1183 = vsel %vm1057, 0, %v1181
    %v1184 = vmul.f32 %v1182, %v1182
    %v1185 = vmul.f32 %v1184, -0.001358992
    %v1186 = vadd.f32 %v1185, 0.041655596
    %v1187 = vmul.f32 %v1184, %v1186
    %v1188 = vadd.f32 %v1187, -0.4999988
    %v1189 = vmul.f32 %v1184, %v1188
    %v1190 = vadd.f32 1.0, %v1189
    %v1191 = vmul.f32 %v1182, %v1182
    %v1192 = vmul.f32 %v1191, -0.00019511016
    %v1193 = vadd.f32 %v1192, 0.008332121
    %v1194 = vmul.f32 %v1191, %v1193
    %v1195 = vadd.f32 %v1194, -0.16666654
    %v1196 = vmul.f32 %v1191, %v1195
    %v1197 = vadd.f32 %v1196, 1.0
    %v1198 = vmul.f32 %v1197, %v1182
    %vm1199 = vweird.f32 %v1055
    %v1200 = vadd.s32 %v1183, 3
    %v1201 = vand.u32 %v1200, 3
    %vm1202 = vcmp.lt.s32.totalorder %v1201, 2
    %vm1203 = vcmp.eq.s32.totalorder %v1201, 0
    %v1204 = vxor.u32 %v1198, 2147483648
    %v1205 = vsel %vm1203, %v1190, %v1204
    %vm1206 = vcmp.eq.s32.totalorder %v1201, 2
    %v1207 = vxor.u32 %v1190, 2147483648
    %v1208 = vsel %vm1206, %v1207, %v1198
    %v1209 = vsel %vm1202, %v1205, %v1208
    %v1210 = vsel %vm1199, nan, %v1209
    %1212 = vrot.lane.b32.xlu0 %v1210, 64
    %v1213 = vpop.permute.xlu0 %1212
    %vm1215 = vcmask 654848
    %1216 = vst.msk [vmem:[#allocation2] sm:$0xff] %vm1215, %v1213
    %v1217 = vand.u32 2147483647, %v1055
    %vm1218 = vcmp.le.f32.partialorder %v1217, 0.7853982
    %vm1219 = vcmp.lt.s32.totalorder %v1055, 0
    %v1220 = vand.u32 %v1055, 2139095040
    %v1221 = vshrl.u32 %v1220, 23
    %v1222 = vsub.s32 %v1221, 127
    %v1223 = vand.u32 2147483647, %v1055
    %v1224 = vand.u32 %v1223, 8388607
    %v1225 = vor.u32 %v1224, 8388608
    %v1226 = vsub.s32 0, %v1225
    %v1227 = vadd.s32 %v1222, 1
    %vm1228 = vcmp.gt.s32.totalorder %v1227, 0
    %v1229 = vsel %vm1228, %v1227, 0
    %v1230 = vshrl.u32 %v1229, 5
    %v1231 = vand.u32 %v1229, 31
    %v1232 = vsub.s32 32, %v1231
    %v1233 = vshrl.u32 683565275, %v1232
    %v1234 = vshll.u32 683565275, %v1231
    %v1235 = vshrl.u32 2475754826, %v1232
    %v1236 = vor.u32 %v1234, %v1235
    %v1237 = vshll.u32 2475754826, %v1231
    %v1238 = vshrl.u32 2131351028, %v1232
    %v1239 = vor.u32 %v1237, %v1238
    %v1240 = vshll.u32 2131351028, %v1231
    %v1241 = vshrl.u32 2102212464, %v1232
    %v1242 = vor.u32 %v1240, %v1241
    %v1243 = vshll.u32 2102212464, %v1231
    %v1244 = vshrl.u32 920167782, %v1232
    %v1245 = vor.u32 %v1243, %v1244
    %v1246 = vshll.u32 920167782, %v1231
    %v1247 = vshrl.u32 1326507024, %v1232
    %v1248 = vor.u32 %v1246, %v1247
    %vm1249 = vcmp.lt.s32.totalorder %v1230, 1
    %vm1250 = vcmp.lt.s32.totalorder %v1230, 2
    %vm1251 = vcmp.lt.s32.totalorder %v1230, 3
    %vm1252 = vcmp.lt.s32.totalorder %v1230, 4
    %v1253 = vsel %vm1249, %v1233, %v1236
    %v1254 = vsel %vm1252, %v1242, 2102212464
    %v1255 = vsel %vm1251, %v1239, %v1254
    %v1256 = vsel %vm1250, %v1253, %v1255
    %v1257 = vsel %vm1249, %v1236, %v1239
    %v1258 = vsel %vm1252, %v1245, 920167782
    %v1259 = vsel %vm1251, %v1242, %v1258
    %v1260 = vsel %vm1250, %v1257, %v1259
    %v1261 = vsel %vm1249, %v1239, %v1242
    %v1262 = vsel %vm1252, %v1248, 1326507024
    %v1263 = vsel %vm1251, %v1245, %v1262
    %v1264 = vsel %vm1250, %v1261, %v1263
    %v1265 = vshll.u32 %v1225, 8
    %v1266 = vand.u32 %v1265, 65535
    %v1267 = vshrl.u32 %v1265, 16
    %v1268 = vand.u32 %v1264, 65535
    %v1269 = vshrl.u32 %v1264, 16
    %v1270 = vmul.u32 %v1266, %v1268
    %v1271 = vmul.u32 %v1266, %v1269
    %v1272 = vmul.u32 %v1267, %v1268
    %v1273 = vmul.u32 %v1267, %v1269
    %v1274 = vshll.u32 %v1271, 16
    %v1275 = vshrl.u32 %v1271, 16
    %v1276 = vshll.u32 %v1272, 16
    %v1277 = vshrl.u32 %v1272, 16
    %vm1278 = vc.u32 %v1270, %v1274
    %v1279 = vsel %vm1278, 1, 0
    %v1280 = vadd.s32 %v1270, %v1274
    %v1281 = vadd.s32 %v1273, %v1279
    %vm1282 = vc.u32 %v1280, %v1276
    %v1283 = vsel %vm1282, 1, 0
    %v1284 = vadd.s32 %v1280, %v1276
    %v1285 = vadd.s32 %v1281, %v1283
    %v1286 = vadd.s32 %v1285, %v1275
    %v1287 = vadd.s32 %v1286, %v1277
    %v1288 = vand.u32 %v1265, 65535
    %v1289 = vshrl.u32 %v1265, 16
    %v1290 = vand.u32 %v1260, 65535
    %v1291 = vshrl.u32 %v1260, 16
    %v1292 = vmul.u32 %v1288, %v1290
    %v1293 = vmul.u32 %v1288, %v1291
    %v1294 = vmul.u32 %v1289, %v1290
    %v1295 = vmul.u32 %v1289, %v1291
    %v1296 = vshll.u32 %v1293, 16
    %v1297 = vshrl.u32 %v1293, 16
    %v1298 = vshll.u32 %v1294, 16
    %v1299 = vshrl.u32 %v1294, 16
    %vm1300 = vc.u32 %v1292, %v1296
    %v1301 = vsel %vm1300, 1, 0
    %v1302 = vadd.s32 %v1292, %v1296
    %v1303 = vadd.s32 %v1295, %v1301
    %vm1304 = vc.u32 %v1302, %v1298
    %v1305 = vsel %vm1304, 1, 0
    %v1306 = vadd.s32 %v1302, %v1298
    %v1307 = vadd.s32 %v1303, %v1305
    %v1308 = vadd.s32 %v1307, %v1297
    %v1309 = vadd.s32 %v1308, %v1299
    %v1310 = vmul.u32 %v1265, %v1256
    %v1311 = vadd.s32 %v1287, %v1306
    %vm1312 = vc.u32 %v1287, %v1306
    %v1313 = vadd.s32 %v1309, 1
    %v1314 = vsel %vm1312, %v1313, %v1309
    %v1315 = vadd.s32 %v1310, %v1314
    %v1316 = vadd.s32 %v1315, 536870912
    %v1317 = vshrl.u32 %v1316, 30
    %v1318 = vshll.u32 %v1317, 30
    %v1319 = vsub.s32 %v1315, %v1318
    %vm1320 = vcmp.lt.s32.totalorder %v1319, 0
    %v1321 = vsub.s32 0, %v1319
    %v1322 = vsel %vm1320, %v1321, %v1319
    %v1323 = vclz %v1322
    %v1324 = vsub.s32 %v1323, 2
    %vm1325 = vcmp.gt.s32.totalorder 0, %v1324
    %v1326 = vsel %vm1325, 0, %v1324
    %v1327 = vsub.s32 32, %v1326
    %v1328 = vshll.u32 %v1319, %v1326
    %v1329 = vshrl.u32 %v1311, %v1327
    %v1330 = vor.u32 %v1328, %v1329
    %v1331 = vsub.s32 4294967266, %v1326
    %v1332 = vadd.s32 %v1331, 127
    %v1333 = vshll.u32 %v1332, 23
    %v1334 = vor.u32 4788187, %v1333
    %v1335 = vand.u32 2147483647, %v1334
    %v1337 = vcvt.s32.f32 %v1330
    %v1338 = vmul.f32 %v1337, %v1335
    %v1339 = vxor.u32 %v1338, 2147483648
    %v1340 = vsel %vm1219, %v1339, %v1338
    %v1341 = vsub.s32 4, %v1317
    %v1342 = vsel %vm1219, %v1341, %v1317
    %v1343 = vsel %vm1218, %v1055, %v1340
    %v1344 = vsel %vm1218, 0, %v1342
    %v1345 = vmul.f32 %v1343, %v1343
    %v1346 = vmul.f32 %v1345, -0.001358992
    %v1347 = vadd.f32 %v1346, 0.041655596
    %v1348 = vmul.f32 %v1345, %v1347
    %v1349 = vadd.f32 %v1348, -0.4999988
    %v1350 = vmul.f32 %v1345, %v1349
    %v1351 = vadd.f32 1.0, %v1350
    %v1352 = vmul.f32 %v1343, %v1343
    %v1353 = vmul.f32 %v1352, -0.00019511016
    %v1354 = vadd.f32 %v1353, 0.008332121
    %v1355 = vmul.f32 %v1352, %v1354
    %v1356 = vadd.f32 %v1355, -0.16666654
    %v1357 = vmul.f32 %v1352, %v1356
    %v1358 = vadd.f32 %v1357, 1.0
    %v1359 = vmul.f32 %v1358, %v1343
    %vm1360 = vweird.f32 %v1055
    %v1361 = vand.u32 %v1344, 3
    %vm1362 = vcmp.lt.s32.totalorder %v1361, 2
    %vm1363 = vcmp.eq.s32.totalorder %v1361, 0
    %v1364 = vxor.u32 %v1359, 2147483648
    %v1365 = vsel %vm1363, %v1351, %v1364
    %vm1366 = vcmp.eq.s32.totalorder %v1361, 2
    %v1367 = vxor.u32 %v1351, 2147483648
    %v1368 = vsel %vm1366, %v1367, %v1359
    %v1369 = vsel %vm1362, %v1365, %v1368
    %v1370 = vsel %vm1360, nan, %v1369
    %1371 = vst.msk [vmem:[#allocation2 + $0x8] sm:$0xff] %vm88, %v1370
    %v1372 = vld [vmem:[#allocation2] sm:$0xff]
    %v1373 = vld [vmem:[#allocation2 + $0x8] sm:$0xff]
    %v1374 = vld [vmem:[#allocation6] sm:$0xff]
    %v1375 = vld [vmem:[#allocation6 + $0x8] sm:$0xff]
    %v1376 = vld [vmem:[#allocation6 + $0x10] sm:$0xff]
    %v1377 = vld [vmem:[#allocation6 + $0x18] sm:$0xff]
    %v1378 = vld [vmem:[#allocation6 + $0x20] sm:$0xff]
    %v1379 = vld [vmem:[#allocation6 + $0x28] sm:$0xff]
    %v1380 = vld [vmem:[#allocation6 + $0x30] sm:$0xff]
    %v1381 = vld [vmem:[#allocation6 + $0x38] sm:$0xff]
    %v1382 = vld [vmem:[#allocation6 + $0x40] sm:$0xff]
    %v1383 = vld [vmem:[#allocation6 + $0x48] sm:$0xff]
    %v1384 = vld [vmem:[#allocation6 + $0x50] sm:$0xff]
    %v1385 = vld [vmem:[#allocation6 + $0x58] sm:$0xff]
    %v1386 = vld [vmem:[#allocation6 + $0x60] sm:$0xff]
    %v1387 = vld [vmem:[#allocation6 + $0x68] sm:$0xff]
    %v1388 = vld [vmem:[#allocation6 + $0x70] sm:$0xff]
    %v1389 = vld [vmem:[#allocation6 + $0x78] sm:$0xff]
    %v1390 = vld [vmem:[#allocation6 + $0x80] sm:$0xff]
    %v1391 = vld [vmem:[#allocation6 + $0x88] sm:$0xff]
    %v1392 = vld [vmem:[#allocation6 + $0x90] sm:$0xff]
    %v1393 = vld [vmem:[#allocation6 + $0x98] sm:$0xff]
    %v1394 = vld [vmem:[#allocation6 + $0xa0] sm:$0xff]
    %v1395 = vld [vmem:[#allocation6 + $0xa8] sm:$0xff]
    %v1396 = vld [vmem:[#allocation6 + $0xb0] sm:$0xff]
    %v1397 = vld [vmem:[#allocation6 + $0xb8] sm:$0xff]
    %v1398 = vld [vmem:[#allocation6 + $0xc0] sm:$0xff]
    %v1399 = vld [vmem:[#allocation6 + $0xc8] sm:$0xff]
    %v1400 = vld [vmem:[#allocation6 + $0xd0] sm:$0xff]
    %v1401 = vld [vmem:[#allocation6 + $0xd8] sm:$0xff]
    %v1402 = vld [vmem:[#allocation6 + $0xe0] sm:$0xff]
    %v1403 = vld [vmem:[#allocation6 + $0xe8] sm:$0xff]
    %v1404 = vld [vmem:[#allocation6 + $0xf0] sm:$0xff]
    %v1405 = vld [vmem:[#allocation6 + $0xf8] sm:$0xff]
    %v1406 = vld [vmem:[%s2] sm:$0x1]
    %v1408 = vperm.slane %v1406, 0
    %1410 = vmatpush.msra.mxu0 %v1389
    %1411 = vmatpush.msra.mxu0 %v1388
    %1412 = vmatpush.msra.mxu0 %v1387
    %1413 = vmatpush.msra.mxu0 %v1386
    %1414 = vmatpush.msra.mxu0 %v1385
    %1415 = vmatpush.msra.mxu0 %v1384
    %1416 = vmatpush.msra.mxu0 %v1383
    %1417 = vmatpush.msra.mxu0 %v1382
    %1418 = vmatpush.msra.mxu0 %v1381
    %1419 = vmatpush.msra.mxu0 %v1380
    %1420 = vmatpush.msra.mxu0 %v1379
    %1421 = vmatpush.msra.mxu0 %v1378
    %1422 = vmatpush.msra.mxu0 %v1377
    %1423 = vmatpush.msra.mxu0 %v1376
    %1424 = vmatpush.msra.mxu0 %v1375
    %1425 = vmatpush.msra.mxu0 %v1374
    %1426 = vmatmul.f32.gmra.mxu0 %v1372
    %v1427 = vpop.f32.mrf.mxu0
    %v1428 = vadd.f32 %v1408, %v1427
    %1429 = vdwg.mxu0
    %1430 = vmatpush.msra.mxu0 %v1405
    %1431 = vmatpush.msra.mxu0 %v1404
    %1432 = vmatpush.msra.mxu0 %v1403
    %1433 = vmatpush.msra.mxu0 %v1402
    %1434 = vmatpush.msra.mxu0 %v1401
    %1435 = vmatpush.msra.mxu0 %v1400
    %1436 = vmatpush.msra.mxu0 %v1399
    %1437 = vmatpush.msra.mxu0 %v1398
    %1438 = vmatpush.msra.mxu0 %v1397
    %1439 = vmatpush.msra.mxu0 %v1396
    %1440 = vmatpush.msra.mxu0 %v1395
    %1441 = vmatpush.msra.mxu0 %v1394
    %1442 = vmatpush.msra.mxu0 %v1393
    %1443 = vmatpush.msra.mxu0 %v1392
    %1444 = vmatpush.msra.mxu0 %v1391
    %1445 = vmatpush.msra.mxu0 %v1390
    %1446 = vmatmul.f32.gmra.mxu0 %v1373
    %v1447 = vpop.f32.mrf.mxu0
    %v1448 = vadd.f32 %v1428, %v1447
    %1449 = vdwg.mxu0
    %v1450 = vmax.f32 %v1448, 0.0
    %v1451 = vld [vmem:[#allocation8] sm:$0xff]
    %v1452 = vld [vmem:[#allocation8 + $0x8] sm:$0xff]
    %v1453 = vld [vmem:[#allocation8 + $0x10] sm:$0xff]
    %v1454 = vld [vmem:[#allocation8 + $0x18] sm:$0xff]
    %v1455 = vld [vmem:[#allocation8 + $0x20] sm:$0xff]
    %v1456 = vld [vmem:[#allocation8 + $0x28] sm:$0xff]
    %v1457 = vld [vmem:[#allocation8 + $0x30] sm:$0xff]
    %v1458 = vld [vmem:[#allocation8 + $0x38] sm:$0xff]
    %v1459 = vld [vmem:[#allocation8 + $0x40] sm:$0xff]
    %v1460 = vld [vmem:[#allocation8 + $0x48] sm:$0xff]
    %v1461 = vld [vmem:[#allocation8 + $0x50] sm:$0xff]
    %v1462 = vld [vmem:[#allocation8 + $0x58] sm:$0xff]
    %v1463 = vld [vmem:[#allocation8 + $0x60] sm:$0xff]
    %v1464 = vld [vmem:[#allocation8 + $0x68] sm:$0xff]
    %v1465 = vld [vmem:[#allocation8 + $0x70] sm:$0xff]
    %v1466 = vld [vmem:[#allocation8 + $0x78] sm:$0xff]
    %v1467 = vld [vmem:[%s4] sm:$0x1]
    %v1469 = vperm.slane %v1467, 0
    %1471 = vmatpush.msra.mxu0 %v1466
    %1472 = vmatpush.msra.mxu0 %v1465
    %1473 = vmatpush.msra.mxu0 %v1464
    %1474 = vmatpush.msra.mxu0 %v1463
    %1475 = vmatpush.msra.mxu0 %v1462
    %1476 = vmatpush.msra.mxu0 %v1461
    %1477 = vmatpush.msra.mxu0 %v1460
    %1478 = vmatpush.msra.mxu0 %v1459
    %1479 = vmatpush.msra.mxu0 %v1458
    %1480 = vmatpush.msra.mxu0 %v1457
    %1481 = vmatpush.msra.mxu0 %v1456
    %1482 = vmatpush.msra.mxu0 %v1455
    %1483 = vmatpush.msra.mxu0 %v1454
    %1484 = vmatpush.msra.mxu0 %v1453
    %1485 = vmatpush.msra.mxu0 %v1452
    %1486 = vmatpush.msra.mxu0 %v1451
    %1487 = vmatmul.f32.gmra.mxu0 %v1450
    %v1488 = vpop.f32.mrf.mxu0
    %v1489 = vadd.f32 %v1469, %v1488
    %1490 = vdwg.mxu0
    %v1491 = vmax.f32 %v1489, 0.0
    %v1492 = vld [vmem:[#allocation9] sm:$0xff]
    %v1493 = vld [vmem:[#allocation9 + $0x8] sm:$0xff]
    %v1494 = vld [vmem:[#allocation9 + $0x10] sm:$0xff]
    %v1495 = vld [vmem:[#allocation9 + $0x18] sm:$0xff]
    %v1496 = vld [vmem:[#allocation9 + $0x20] sm:$0xff]
    %v1497 = vld [vmem:[#allocation9 + $0x28] sm:$0xff]
    %v1498 = vld [vmem:[#allocation9 + $0x30] sm:$0xff]
    %v1499 = vld [vmem:[#allocation9 + $0x38] sm:$0xff]
    %v1500 = vld [vmem:[#allocation9 + $0x40] sm:$0xff]
    %v1501 = vld [vmem:[#allocation9 + $0x48] sm:$0xff]
    %v1502 = vld [vmem:[#allocation9 + $0x50] sm:$0xff]
    %v1503 = vld [vmem:[#allocation9 + $0x58] sm:$0xff]
    %v1504 = vld [vmem:[#allocation9 + $0x60] sm:$0xff]
    %v1505 = vld [vmem:[#allocation9 + $0x68] sm:$0xff]
    %v1506 = vld [vmem:[#allocation9 + $0x70] sm:$0xff]
    %v1507 = vld [vmem:[#allocation9 + $0x78] sm:$0xff]
    %1508 = vmatpush.msra.mxu0 %v1507
    %1509 = vmatpush.msra.mxu0 %v1506
    %1510 = vmatpush.msra.mxu0 %v1505
    %1511 = vmatpush.msra.mxu0 %v1504
    %1512 = vmatpush.msra.mxu0 %v1503
    %1513 = vmatpush.msra.mxu0 %v1502
    %1514 = vmatpush.msra.mxu0 %v1501
    %1515 = vmatpush.msra.mxu0 %v1500
    %1516 = vmatpush.msra.mxu0 %v1499
    %1517 = vmatpush.msra.mxu0 %v1498
    %1518 = vmatpush.msra.mxu0 %v1497
    %1519 = vmatpush.msra.mxu0 %v1496
    %1520 = vmatpush.msra.mxu0 %v1495
    %1521 = vmatpush.msra.mxu0 %v1494
    %1522 = vmatpush.msra.mxu0 %v1493
    %1523 = vmatpush.msra.mxu0 %v1492
    %1524 = vmatmul.f32.gmra.mxu0 %v1491
    %v1525 = vpop.f32.mrf.mxu0
    %v1526 = vadd.f32 0.0, %v1525
    %1527 = vdwg.mxu0
    %1528 = vst [vmem:[#allocation11] sm:$0xff] %v1526
    // Predicated region
    $region42: #{tpu_custom_call.1} parent=1 // pred_check
      _
    $region43: #{tpu_custom_call.1} parent=1 // pred_check_branch
      %1530 = sbr.rel (0) target = $region45
    $region44: #{tpu_custom_call.1} parent=1 // pred_region
      %1532 = vsyncadd [#allocation5], 0
      %s1534 = sshll.u32 [#allocation11], 4
      %s1535 = int_to_ptr.vmem [resolvable:$true] %s1534
      %s1536 = sshll.u32 %s6, 4
      %s1537 = int_to_ptr.hbm [resolvable:$true] %s1536
      %1539 = dma.vmem_to_hbm [thread:$0]  %s1535, 128, %s1537, [#allocation5]
    $region45: #{tpu_custom_call.1} parent=1 // pred_fallthru
      _
    // Predicated region
    $region46: #{tpu_custom_call.1} parent=1 // pred_check
      _
    $region47: #{tpu_custom_call.1} parent=1 // pred_check_branch
      %1541 = sbr.rel (0) target = $region49
    $region48: #{tpu_custom_call.1} parent=1 // pred_region
      %1543 = dma.done [#allocation5], 128
    $region49: #{tpu_custom_call.1} parent=1 // pred_fallthru
      _
    %1544 = vsyncpa [#allocation4], 1
    %1545 = vsyncpa [#allocation7], 1
    %1546 = vsyncpa [#allocation10], 1
    %1547 = vsyncpa [#allocation5], 1

</llo_original>
